<compile_context>
chip_gen: v7x
topology: tpu7x:2x2x1
jax: 0.10.0
libtpu: 0.0.40
codegen_flags: <defaults>
</compile_context>

<pallas_src>
import functools

import jax
import jax.numpy as jnp
from jax import lax
from jax.experimental import pallas as pl
from jax.experimental.pallas import tpu as pltpu

# Module hyper-parameters (RB2DBPN defaults: kernel 8, stride 4, padding 2).
K_SIZE, STRIDE, PADDING = 8, 4, 2
N_PHASE = STRIDE * STRIDE                       # 16 sub-pixel phases
TAPS = tuple((dy, dx) for dy in (-1, 0, 1) for dx in (-1, 0, 1))
CDT = jnp.bfloat16                              # MXU operand dtype (f32 accum)


def _prelu(z, a):
    return jnp.where(z >= 0.0, z, a * z)


# -----------------------------------------------------------------------------
# Fused Pallas kernel: whole residual block for one batch element.
# Feature maps are flat (M, channels) values: row r = y*Lx + x, channels on
# lanes.  A (dy, dx) conv tap is a static row shift of a zero-padded copy
# (+ an edge mask for the dx wrap), so a 3x3-tap conv is one matmul whose K
# concatenates the shifted copies.
# -----------------------------------------------------------------------------
def _rb2dbpn_kernel(Ly, Lx, x_ref, w1_ref, b1_ref, wt1_ref, bt1_ref,
                    w2_ref, b2_ref, wt3_ref, bt3_ref, alpha_ref, out_ref):
    M = Ly * Lx
    halo = ((Lx + 1 + 7) // 8) * 8          # sublane-aligned zero halo >= Lx+1

    a1, at1, a2, at3 = (alpha_ref[0], alpha_ref[1],
                        alpha_ref[2], alpha_ref[3])

    def edge_masks(cin):
        # x-position of every flat row, broadcast over the channel lanes.
        col = lax.broadcasted_iota(jnp.int32, (Ly, Lx, cin), 1).reshape(M, cin)
        return col == 0, col == (Lx - 1)

    def pad_flat(v):
        # (M, cin) -> (M + 2*halo, cin) with zero rows above/below.
        z = jnp.zeros((halo, v.shape[1]), v.dtype)
        return jnp.concatenate([z, v, z], axis=0)

    def shifted(vp, dy, dx, left_edge, right_edge):
        # Row r of the result holds v[y+dy, x+dx] (zero outside the image).
        off = halo + dy * Lx + dx
        s = vp[off:off + M, :]
        if dx == 1:
            s = jnp.where(right_edge, jnp.zeros((), s.dtype), s)
        elif dx == -1:
            s = jnp.where(left_edge, jnp.zeros((), s.dtype), s)
        return s

    # ---- conv1 (1x1): x1 = PReLU(x @ w1 + b1) ----------------------- (M, C)
    x1 = _prelu(jnp.dot(x_ref[0], w1_ref[...],
                        preferred_element_type=jnp.float32)
                + b1_ref[...], a1)

    C = x1.shape[1]
    le_c, re_c = edge_masks(C)

    def deconv(v_f32, w_ref, b_ref, alpha):
        # Transposed conv (k=8, s=4, p=2) in phase space:
        # ONE (M, 9*C) @ (9*C, 16*C) MXU matmul (all 9 taps folded into K).
        vp = pad_flat(v_f32.astype(CDT))
        slab = jnp.concatenate(
            [shifted(vp, dy, dx, le_c, re_c) for dy, dx in TAPS], axis=-1)
        z = jnp.dot(slab, w_ref[...], preferred_element_type=jnp.float32)
        return _prelu(z + b_ref[...], alpha)

    # ---- up_conv1: deconv, 16 phases packed on lanes --------------- (M, 16C)
    h0 = deconv(x1, wt1_ref, bt1_ref, at1)
    h0_bf = h0.astype(CDT)          # keep only the bf16 copy live downstream

    # ---- up_conv2: stride-4 conv evaluated in phase space ------------ (M, C)
    PC = h0_bf.shape[1]
    le_p, re_p = edge_masks(PC)
    h0_pad = pad_flat(h0_bf)
    l0 = jnp.zeros((M, C), jnp.float32)
    for g, dy in enumerate((-1, 0, 1)):
        # dx taps merged into K: (M, 3*16C) @ (3*16C, C), lane-aligned concat.
        slab = jnp.concatenate(
            [shifted(h0_pad, dy, dx, le_p, re_p) for dx in (-1, 0, 1)],
            axis=-1)
        l0 = l0 + jnp.dot(slab, w2_ref[g], preferred_element_type=jnp.float32)
    l0 = _prelu(l0 + b2_ref[...], a2)

    # ---- up_conv3: deconv of the residual (l0 - x1) ---------------- (M, 16C)
    h1 = deconv(l0 - x1, wt3_ref, bt3_ref, at3)

    # residual add; output stays phase-packed => lane-dense 128-wide stores.
    out_ref[0] = (h1 + h0_bf).astype(out_ref.dtype)


# -----------------------------------------------------------------------------
# Weight packing (tiny, traced once; pure gather/concat on (C, C, 8, 8) arrays)
# -----------------------------------------------------------------------------
def _pack_deconv_taps(wt):
    """ConvTranspose2d weight (Cin, Cout, k, k) -> (9, Cin, 16*Cout) tap mats.

    Column order (py*STRIDE + px)*Cout + co matches the phase-packed lanes.
    Output pixel s*q + phase takes input pixel q + d through kernel row
    phase + PADDING - STRIDE*d (zero weight when out of range)."""
    cin, cout = wt.shape[0], wt.shape[1]
    zeros = jnp.zeros((cin, cout), wt.dtype)
    taps = []
    for dy, dx in TAPS:
        blocks = []
        for py in range(STRIDE):
            for px in range(STRIDE):
                ky = py + PADDING - STRIDE * dy
                kx = px + PADDING - STRIDE * dx
                ok = 0 <= ky < K_SIZE and 0 <= kx < K_SIZE
                blocks.append(wt[:, :, ky, kx] if ok else zeros)
        taps.append(jnp.concatenate(blocks, axis=1))           # (Cin, 16*Cout)
    return jnp.stack(taps, axis=0)


def _pack_strided_conv_taps(w):
    """Conv2d weight (Cout, Cin, k, k), consumed in phase space ->
    (9, 16*Cin, Cout) tap matrices; row order (py*STRIDE + px)*Cin + ci.
    Phase `phase` of input block q + d hits kernel row phase + PADDING + STRIDE*d."""
    cout, cin = w.shape[0], w.shape[1]
    zeros = jnp.zeros((cin, cout), w.dtype)
    taps = []
    for dy, dx in TAPS:
        blocks = []
        for py in range(STRIDE):
            for px in range(STRIDE):
                ky = py + PADDING + STRIDE * dy
                kx = px + PADDING + STRIDE * dx
                ok = 0 <= ky < K_SIZE and 0 <= kx < K_SIZE
                blocks.append(w[:, :, ky, kx].T if ok else zeros)
        taps.append(jnp.concatenate(blocks, axis=0))            # (16*Cin, Cout)
    return jnp.stack(taps, axis=0)


# -----------------------------------------------------------------------------
# Forward wrapper
# -----------------------------------------------------------------------------
def rb2dbpn_forward(x_nchw, params):
    N, cin, H, W = x_nchw.shape
    C = params["b1"].shape[0]
    Ly, Lx, M = H, W, H * W
    PC = N_PHASE * C

    # NCHW -> flat (N, H*W, Cin) bf16 maps; tap weights pre-merged along K.
    x_flat = jnp.transpose(x_nchw, (0, 2, 3, 1)).reshape(N, M, cin).astype(CDT)
    w1m = jnp.transpose(params["w1"][:, :, 0, 0]).astype(CDT)          # (Cin, C)
    wt1 = _pack_deconv_taps(params["wt1"]).reshape(9 * C, PC).astype(CDT)
    wt3 = _pack_deconv_taps(params["wt3"]).reshape(9 * C, PC).astype(CDT)
    w2 = _pack_strided_conv_taps(params["w2"]).reshape(3, 3 * PC, C).astype(CDT)
    b1 = params["b1"].reshape(1, C).astype(jnp.float32)
    b2 = params["b2"].reshape(1, C).astype(jnp.float32)
    bt1 = jnp.tile(params["bt1"], N_PHASE).reshape(1, PC).astype(jnp.float32)
    bt3 = jnp.tile(params["bt3"], N_PHASE).reshape(1, PC).astype(jnp.float32)
    alphas = jnp.stack([params["a1"], params["at1"],
                        params["a2"], params["at3"]]).astype(jnp.float32)

    rep2 = lambda n: (0, 0)
    rep3 = lambda n: (0, 0, 0)

    out_phase = pl.pallas_call(
        functools.partial(_rb2dbpn_kernel, Ly, Lx),
        out_shape=jax.ShapeDtypeStruct((N, M, PC), jnp.float32),
        grid=(N,),
        in_specs=[
            pl.BlockSpec((1, M, cin), lambda n: (n, 0, 0)),    # x (flat)
            pl.BlockSpec((cin, C), rep2),                      # w1 (1x1)
            pl.BlockSpec((1, C), rep2),                        # b1
            pl.BlockSpec((9 * C, PC), rep2),                   # wt1 (K-merged)
            pl.BlockSpec((1, PC), rep2),                       # bt1 (tiled)
            pl.BlockSpec((3, 3 * PC, C), rep3),                # w2 (per-dy K)
            pl.BlockSpec((1, C), rep2),                        # b2
            pl.BlockSpec((9 * C, PC), rep2),                   # wt3 (K-merged)
            pl.BlockSpec((1, PC), rep2),                       # bt3 (tiled)
            pl.BlockSpec(memory_space=pltpu.MemorySpace.SMEM), # PReLU alphas
        ],
        out_specs=pl.BlockSpec((1, M, PC), lambda n: (n, 0, 0)),
        compiler_params=pltpu.CompilerParams(
            dimension_semantics=("parallel",)),
    )(x_flat, w1m, b1, wt1, bt1, w2, b2, wt3, bt3, alphas)

    # phase-packed (q_y, q_x, p_y, p_x, c) -> pixel layout (output-only XLA op;
    # at production sizes fold this into the output index_map instead).
    out = out_phase.reshape(N, Ly, Lx, STRIDE, STRIDE, C)
    out = out.transpose(0, 1, 3, 2, 4, 5).reshape(N, STRIDE * Ly, STRIDE * Lx, C)
    return out.transpose(0, 3, 1, 2)                           # NHWC -> NCHW


# -----------------------------------------------------------------------------
# pure-JAX f32 reference (lax convs) for correctness check
# -----------------------------------------------------------------------------
def rb2dbpn_reference(x, p):
    dn = ("NCHW", "OIHW", "NCHW")

    def conv(x, w, b, a, s, pad):
        z = lax.conv_general_dilated(x, w, (s, s), [(pad, pad), (pad, pad)],
                                     dimension_numbers=dn)
        return _prelu(z + b[None, :, None, None], a)

    def deconv(x, wt, b, a, k, s, pad):
        w = jnp.transpose(jnp.flip(wt, axis=(2, 3)), (1, 0, 2, 3))
        z = lax.conv_general_dilated(x, w, (1, 1),
                                     [(k - 1 - pad,) * 2, (k - 1 - pad,) * 2],
                                     lhs_dilation=(s, s),
                                     dimension_numbers=dn)
        return _prelu(z + b[None, :, None, None], a)

    x1 = conv(x, p["w1"], p["b1"], p["a1"], 1, 0)
    h0 = deconv(x1, p["wt1"], p["bt1"], p["at1"], K_SIZE, STRIDE, PADDING)
    l0 = conv(h0, p["w2"], p["b2"], p["a2"], STRIDE, PADDING)
    h1 = deconv(l0 - x1, p["wt3"], p["bt3"], p["at3"], K_SIZE, STRIDE, PADDING)
    return h1 + h0


# -----------------------------------------------------------------------------
# main
# -----------------------------------------------------------------------------
if __name__ == "__main__":
    key = jax.random.PRNGKey(0)
    N, in_filter, num_filter, H, W = 2, 4, 8, 8, 8

    keys = jax.random.split(key, 10)
    params = {
        # conv1: 1x1
        "w1": 0.1 * jax.random.normal(keys[0], (num_filter, in_filter, 1, 1), jnp.float32),
        "b1": 0.1 * jax.random.normal(keys[1], (num_filter,), jnp.float32),
        "a1": jnp.float32(0.25),
        # up_conv1: ConvTranspose2d  (Cin, Cout, k, k)
        "wt1": 0.05 * jax.random.normal(keys[2], (num_filter, num_filter, K_SIZE, K_SIZE), jnp.float32),
        "bt1": 0.1 * jax.random.normal(keys[3], (num_filter,), jnp.float32),
        "at1": jnp.float32(0.25),
        # up_conv2: Conv2d  (Cout, Cin, k, k)
        "w2": 0.05 * jax.random.normal(keys[4], (num_filter, num_filter, K_SIZE, K_SIZE), jnp.float32),
        "b2": 0.1 * jax.random.normal(keys[5], (num_filter,), jnp.float32),
        "a2": jnp.float32(0.25),
        # up_conv3: ConvTranspose2d
        "wt3": 0.05 * jax.random.normal(keys[6], (num_filter, num_filter, K_SIZE, K_SIZE), jnp.float32),
        "bt3": 0.1 * jax.random.normal(keys[7], (num_filter,), jnp.float32),
        "at3": jnp.float32(0.25),
    }
    x = jax.random.normal(keys[8], (N, in_filter, H, W), jnp.float32)

    fwd = jax.jit(rb2dbpn_forward)
    out = jax.block_until_ready(fwd(x, params))
    assert out.shape == (N, num_filter, STRIDE * H, STRIDE * W), out.shape

    ref = jax.block_until_ready(rb2dbpn_reference(x, params))
    # bf16 MXU operands (f32 accumulation) -> relaxed tolerance vs. f32 reference.
    assert jnp.allclose(out, ref, rtol=2e-2, atol=2e-2), \
        float(jnp.max(jnp.abs(out - ref)))
    print("KERNEL_OK")
</pallas_src>

<mosaic_0001>
module attributes {stable_mosaic.version = 11 : i64} {
  func.func @_rb2dbpn_kernel(%arg0: i32, %arg1: memref<1x64x4xbf16, #tpu.memory_space<vmem>>, %arg2: memref<4x8xbf16, #tpu.memory_space<vmem>>, %arg3: memref<1x8xf32, #tpu.memory_space<vmem>>, %arg4: memref<72x128xbf16, #tpu.memory_space<vmem>>, %arg5: memref<1x128xf32, #tpu.memory_space<vmem>>, %arg6: memref<3x384x8xbf16, #tpu.memory_space<vmem>>, %arg7: memref<1x8xf32, #tpu.memory_space<vmem>>, %arg8: memref<72x128xbf16, #tpu.memory_space<vmem>>, %arg9: memref<1x128xf32, #tpu.memory_space<vmem>>, %arg10: memref<4xf32, #tpu.memory_space<smem>>, %arg11: memref<1x64x128xf32, #tpu.memory_space<vmem>>) attributes {dimension_semantics = [#tpu.dimension_semantics<parallel>], iteration_bounds = array<i64: 2>, scalar_prefetch = 0 : i64, scratch_operands = 0 : i64, tpu.core_type = #tpu.core_type<tc>, window_params = [{transform_indices = @transform_0, window_bounds = array<i64: 1, 64, 4>}, {pipeline_mode = #tpu.pipeline_mode<synchronous>, transform_indices = @transform_1, window_bounds = array<i64: 4, 8>}, {pipeline_mode = #tpu.pipeline_mode<synchronous>, transform_indices = @transform_2, window_bounds = array<i64: 1, 8>}, {pipeline_mode = #tpu.pipeline_mode<synchronous>, transform_indices = @transform_3, window_bounds = array<i64: 72, 128>}, {pipeline_mode = #tpu.pipeline_mode<synchronous>, transform_indices = @transform_4, window_bounds = array<i64: 1, 128>}, {pipeline_mode = #tpu.pipeline_mode<synchronous>, transform_indices = @transform_5, window_bounds = array<i64: 3, 384, 8>}, {pipeline_mode = #tpu.pipeline_mode<synchronous>, transform_indices = @transform_6, window_bounds = array<i64: 1, 8>}, {pipeline_mode = #tpu.pipeline_mode<synchronous>, transform_indices = @transform_7, window_bounds = array<i64: 72, 128>}, {pipeline_mode = #tpu.pipeline_mode<synchronous>, transform_indices = @transform_8, window_bounds = array<i64: 1, 128>}, {transform_indices = @transform_9, window_bounds = array<i64: 4>}, {transform_indices = @transform_10, window_bounds = array<i64: 1, 64, 128>}]} {
    %c0 = arith.constant 0 : index
    %0 = memref.load %arg10[%c0] : memref<4xf32, #tpu.memory_space<smem>>
    %c1 = arith.constant 1 : index
    %1 = memref.load %arg10[%c1] : memref<4xf32, #tpu.memory_space<smem>>
    %c2 = arith.constant 2 : index
    %2 = memref.load %arg10[%c2] : memref<4xf32, #tpu.memory_space<smem>>
    %c3 = arith.constant 3 : index
    %3 = memref.load %arg10[%c3] : memref<4xf32, #tpu.memory_space<smem>>
    %c0_0 = arith.constant 0 : index
    %c0_1 = arith.constant 0 : index
    %c0_2 = arith.constant 0 : index
    %4 = vector.load %arg1[%c0_0, %c0_1, %c0_2] : memref<1x64x4xbf16, #tpu.memory_space<vmem>>, vector<1x64x4xbf16>
    %5 = vector.shape_cast %4 : vector<1x64x4xbf16> to vector<64x4xbf16>
    %c0_3 = arith.constant 0 : index
    %c0_4 = arith.constant 0 : index
    %6 = vector.load %arg2[%c0_3, %c0_4] : memref<4x8xbf16, #tpu.memory_space<vmem>>, vector<4x8xbf16>
    %cst = arith.constant dense<0.000000e+00> : vector<64x8xf32>
    %7 = tpu.matmul %5, %6, %cst {dimension_numbers = #tpu.dot_dimension_numbers<[1], [0], [0], [1], [0, 0, 1, 1], [], []>} : vector<64x4xbf16>, vector<4x8xbf16>, vector<64x8xf32> -> vector<64x8xf32>
    %c0_5 = arith.constant 0 : index
    %c0_6 = arith.constant 0 : index
    %8 = vector.load %arg3[%c0_5, %c0_6] : memref<1x8xf32, #tpu.memory_space<vmem>>, vector<1x8xf32>
    %9 = vector.broadcast %8 : vector<1x8xf32> to vector<64x8xf32>
    %10 = arith.addf %7, %9 : vector<64x8xf32>
    %cst_7 = arith.constant 0.000000e+00 : f32
    %11 = vector.broadcast %cst_7 : f32 to vector<64x8xf32>
    %12 = arith.cmpf oge, %10, %11 : vector<64x8xf32>
    %13 = vector.broadcast %0 : f32 to vector<64x8xf32>
    %14 = arith.mulf %13, %10 : vector<64x8xf32>
    %15 = arith.select %12, %10, %14 : vector<64x8xi1>, vector<64x8xf32>
    %16 = tpu.iota {dimensions = array<i32: 1>} : vector<8x8x8xi32>
    %17 = vector.shape_cast %16 : vector<8x8x8xi32> to vector<64x8xi32>
    %c0_i32 = arith.constant 0 : i32
    %18 = vector.broadcast %c0_i32 : i32 to vector<64x8xi32>
    %19 = arith.cmpi eq, %17, %18 : vector<64x8xi32>
    %c7_i32 = arith.constant 7 : i32
    %20 = vector.broadcast %c7_i32 : i32 to vector<64x8xi32>
    %21 = arith.cmpi eq, %17, %20 : vector<64x8xi32>
    %22 = arith.truncf %15 : vector<64x8xf32> to vector<64x8xbf16>
    %cst_8 = arith.constant 0.000000e+00 : bf16
    %23 = vector.broadcast %cst_8 : bf16 to vector<16x8xbf16>
    %24 = tpu.concatenate %23, %22, %23 in 0 : vector<16x8xbf16>, vector<64x8xbf16>, vector<16x8xbf16> -> vector<96x8xbf16>
    %25 = vector.extract_strided_slice %24 {offsets = [7, 0], sizes = [64, 8], strides = [1, 1]} : vector<96x8xbf16> to vector<64x8xbf16>
    %cst_9 = arith.constant 0.000000e+00 : bf16
    %26 = vector.broadcast %cst_9 : bf16 to vector<64x8xbf16>
    %27 = arith.select %19, %26, %25 : vector<64x8xi1>, vector<64x8xbf16>
    %28 = vector.extract_strided_slice %24 {offsets = [8, 0], sizes = [64, 8], strides = [1, 1]} : vector<96x8xbf16> to vector<64x8xbf16>
    %29 = vector.extract_strided_slice %24 {offsets = [9, 0], sizes = [64, 8], strides = [1, 1]} : vector<96x8xbf16> to vector<64x8xbf16>
    %cst_10 = arith.constant 0.000000e+00 : bf16
    %30 = vector.broadcast %cst_10 : bf16 to vector<64x8xbf16>
    %31 = arith.select %21, %30, %29 : vector<64x8xi1>, vector<64x8xbf16>
    %32 = vector.extract_strided_slice %24 {offsets = [15, 0], sizes = [64, 8], strides = [1, 1]} : vector<96x8xbf16> to vector<64x8xbf16>
    %cst_11 = arith.constant 0.000000e+00 : bf16
    %33 = vector.broadcast %cst_11 : bf16 to vector<64x8xbf16>
    %34 = arith.select %19, %33, %32 : vector<64x8xi1>, vector<64x8xbf16>
    %35 = vector.extract_strided_slice %24 {offsets = [16, 0], sizes = [64, 8], strides = [1, 1]} : vector<96x8xbf16> to vector<64x8xbf16>
    %36 = vector.extract_strided_slice %24 {offsets = [17, 0], sizes = [64, 8], strides = [1, 1]} : vector<96x8xbf16> to vector<64x8xbf16>
    %cst_12 = arith.constant 0.000000e+00 : bf16
    %37 = vector.broadcast %cst_12 : bf16 to vector<64x8xbf16>
    %38 = arith.select %21, %37, %36 : vector<64x8xi1>, vector<64x8xbf16>
    %39 = vector.extract_strided_slice %24 {offsets = [23, 0], sizes = [64, 8], strides = [1, 1]} : vector<96x8xbf16> to vector<64x8xbf16>
    %cst_13 = arith.constant 0.000000e+00 : bf16
    %40 = vector.broadcast %cst_13 : bf16 to vector<64x8xbf16>
    %41 = arith.select %19, %40, %39 : vector<64x8xi1>, vector<64x8xbf16>
    %42 = vector.extract_strided_slice %24 {offsets = [24, 0], sizes = [64, 8], strides = [1, 1]} : vector<96x8xbf16> to vector<64x8xbf16>
    %43 = vector.extract_strided_slice %24 {offsets = [25, 0], sizes = [64, 8], strides = [1, 1]} : vector<96x8xbf16> to vector<64x8xbf16>
    %cst_14 = arith.constant 0.000000e+00 : bf16
    %44 = vector.broadcast %cst_14 : bf16 to vector<64x8xbf16>
    %45 = arith.select %21, %44, %43 : vector<64x8xi1>, vector<64x8xbf16>
    %46 = tpu.concatenate %27, %28, %31, %34, %35, %38, %41, %42, %45 in 1 : vector<64x8xbf16>, vector<64x8xbf16>, vector<64x8xbf16>, vector<64x8xbf16>, vector<64x8xbf16>, vector<64x8xbf16>, vector<64x8xbf16>, vector<64x8xbf16>, vector<64x8xbf16> -> vector<64x72xbf16>
    %c0_15 = arith.constant 0 : index
    %c0_16 = arith.constant 0 : index
    %47 = vector.load %arg4[%c0_15, %c0_16] : memref<72x128xbf16, #tpu.memory_space<vmem>>, vector<72x128xbf16>
    %cst_17 = arith.constant dense<0.000000e+00> : vector<64x128xf32>
    %48 = tpu.matmul %46, %47, %cst_17 {dimension_numbers = #tpu.dot_dimension_numbers<[1], [0], [0], [1], [0, 0, 1, 1], [], []>} : vector<64x72xbf16>, vector<72x128xbf16>, vector<64x128xf32> -> vector<64x128xf32>
    %c0_18 = arith.constant 0 : index
    %c0_19 = arith.constant 0 : index
    %49 = vector.load %arg5[%c0_18, %c0_19] : memref<1x128xf32, #tpu.memory_space<vmem>>, vector<1x128xf32>
    %50 = vector.broadcast %49 : vector<1x128xf32> to vector<64x128xf32>
    %51 = arith.addf %48, %50 : vector<64x128xf32>
    %cst_20 = arith.constant 0.000000e+00 : f32
    %52 = vector.broadcast %cst_20 : f32 to vector<64x128xf32>
    %53 = arith.cmpf oge, %51, %52 : vector<64x128xf32>
    %54 = vector.broadcast %1 : f32 to vector<64x128xf32>
    %55 = arith.mulf %54, %51 : vector<64x128xf32>
    %56 = arith.select %53, %51, %55 : vector<64x128xi1>, vector<64x128xf32>
    %57 = arith.truncf %56 : vector<64x128xf32> to vector<64x128xbf16>
    %58 = tpu.iota {dimensions = array<i32: 1>} : vector<8x8x128xi32>
    %59 = vector.shape_cast %58 : vector<8x8x128xi32> to vector<64x128xi32>
    %c0_i32_21 = arith.constant 0 : i32
    %60 = vector.broadcast %c0_i32_21 : i32 to vector<64x128xi32>
    %61 = arith.cmpi eq, %59, %60 : vector<64x128xi32>
    %c7_i32_22 = arith.constant 7 : i32
    %62 = vector.broadcast %c7_i32_22 : i32 to vector<64x128xi32>
    %63 = arith.cmpi eq, %59, %62 : vector<64x128xi32>
    %cst_23 = arith.constant 0.000000e+00 : bf16
    %64 = vector.broadcast %cst_23 : bf16 to vector<16x128xbf16>
    %65 = tpu.concatenate %64, %57, %64 in 0 : vector<16x128xbf16>, vector<64x128xbf16>, vector<16x128xbf16> -> vector<96x128xbf16>
    %cst_24 = arith.constant 0.000000e+00 : f32
    %66 = vector.broadcast %cst_24 : f32 to vector<64x8xf32>
    %67 = vector.extract_strided_slice %65 {offsets = [7, 0], sizes = [64, 128], strides = [1, 1]} : vector<96x128xbf16> to vector<64x128xbf16>
    %cst_25 = arith.constant 0.000000e+00 : bf16
    %68 = vector.broadcast %cst_25 : bf16 to vector<64x128xbf16>
    %69 = arith.select %61, %68, %67 : vector<64x128xi1>, vector<64x128xbf16>
    %70 = vector.extract_strided_slice %65 {offsets = [8, 0], sizes = [64, 128], strides = [1, 1]} : vector<96x128xbf16> to vector<64x128xbf16>
    %71 = vector.extract_strided_slice %65 {offsets = [9, 0], sizes = [64, 128], strides = [1, 1]} : vector<96x128xbf16> to vector<64x128xbf16>
    %cst_26 = arith.constant 0.000000e+00 : bf16
    %72 = vector.broadcast %cst_26 : bf16 to vector<64x128xbf16>
    %73 = arith.select %63, %72, %71 : vector<64x128xi1>, vector<64x128xbf16>
    %74 = tpu.concatenate %69, %70, %73 in 1 : vector<64x128xbf16>, vector<64x128xbf16>, vector<64x128xbf16> -> vector<64x384xbf16>
    %c0_27 = arith.constant 0 : index
    %c0_28 = arith.constant 0 : index
    %c0_29 = arith.constant 0 : index
    %75 = vector.load %arg6[%c0_27, %c0_28, %c0_29] : memref<3x384x8xbf16, #tpu.memory_space<vmem>>, vector<1x384x8xbf16>
    %76 = vector.shape_cast %75 : vector<1x384x8xbf16> to vector<384x8xbf16>
    %cst_30 = arith.constant dense<0.000000e+00> : vector<64x8xf32>
    %77 = tpu.matmul %74, %76, %cst_30 {dimension_numbers = #tpu.dot_dimension_numbers<[1], [0], [0], [1], [0, 0, 1, 1], [], []>} : vector<64x384xbf16>, vector<384x8xbf16>, vector<64x8xf32> -> vector<64x8xf32>
    %78 = arith.addf %66, %77 : vector<64x8xf32>
    %79 = vector.extract_strided_slice %65 {offsets = [15, 0], sizes = [64, 128], strides = [1, 1]} : vector<96x128xbf16> to vector<64x128xbf16>
    %cst_31 = arith.constant 0.000000e+00 : bf16
    %80 = vector.broadcast %cst_31 : bf16 to vector<64x128xbf16>
    %81 = arith.select %61, %80, %79 : vector<64x128xi1>, vector<64x128xbf16>
    %82 = vector.extract_strided_slice %65 {offsets = [16, 0], sizes = [64, 128], strides = [1, 1]} : vector<96x128xbf16> to vector<64x128xbf16>
    %83 = vector.extract_strided_slice %65 {offsets = [17, 0], sizes = [64, 128], strides = [1, 1]} : vector<96x128xbf16> to vector<64x128xbf16>
    %cst_32 = arith.constant 0.000000e+00 : bf16
    %84 = vector.broadcast %cst_32 : bf16 to vector<64x128xbf16>
    %85 = arith.select %63, %84, %83 : vector<64x128xi1>, vector<64x128xbf16>
    %86 = tpu.concatenate %81, %82, %85 in 1 : vector<64x128xbf16>, vector<64x128xbf16>, vector<64x128xbf16> -> vector<64x384xbf16>
    %c1_33 = arith.constant 1 : index
    %c0_34 = arith.constant 0 : index
    %c0_35 = arith.constant 0 : index
    %87 = vector.load %arg6[%c1_33, %c0_34, %c0_35] : memref<3x384x8xbf16, #tpu.memory_space<vmem>>, vector<1x384x8xbf16>
    %88 = vector.shape_cast %87 : vector<1x384x8xbf16> to vector<384x8xbf16>
    %cst_36 = arith.constant dense<0.000000e+00> : vector<64x8xf32>
    %89 = tpu.matmul %86, %88, %cst_36 {dimension_numbers = #tpu.dot_dimension_numbers<[1], [0], [0], [1], [0, 0, 1, 1], [], []>} : vector<64x384xbf16>, vector<384x8xbf16>, vector<64x8xf32> -> vector<64x8xf32>
    %90 = arith.addf %78, %89 : vector<64x8xf32>
    %91 = vector.extract_strided_slice %65 {offsets = [23, 0], sizes = [64, 128], strides = [1, 1]} : vector<96x128xbf16> to vector<64x128xbf16>
    %cst_37 = arith.constant 0.000000e+00 : bf16
    %92 = vector.broadcast %cst_37 : bf16 to vector<64x128xbf16>
    %93 = arith.select %61, %92, %91 : vector<64x128xi1>, vector<64x128xbf16>
    %94 = vector.extract_strided_slice %65 {offsets = [24, 0], sizes = [64, 128], strides = [1, 1]} : vector<96x128xbf16> to vector<64x128xbf16>
    %95 = vector.extract_strided_slice %65 {offsets = [25, 0], sizes = [64, 128], strides = [1, 1]} : vector<96x128xbf16> to vector<64x128xbf16>
    %cst_38 = arith.constant 0.000000e+00 : bf16
    %96 = vector.broadcast %cst_38 : bf16 to vector<64x128xbf16>
    %97 = arith.select %63, %96, %95 : vector<64x128xi1>, vector<64x128xbf16>
    %98 = tpu.concatenate %93, %94, %97 in 1 : vector<64x128xbf16>, vector<64x128xbf16>, vector<64x128xbf16> -> vector<64x384xbf16>
    %c2_39 = arith.constant 2 : index
    %c0_40 = arith.constant 0 : index
    %c0_41 = arith.constant 0 : index
    %99 = vector.load %arg6[%c2_39, %c0_40, %c0_41] : memref<3x384x8xbf16, #tpu.memory_space<vmem>>, vector<1x384x8xbf16>
    %100 = vector.shape_cast %99 : vector<1x384x8xbf16> to vector<384x8xbf16>
    %cst_42 = arith.constant dense<0.000000e+00> : vector<64x8xf32>
    %101 = tpu.matmul %98, %100, %cst_42 {dimension_numbers = #tpu.dot_dimension_numbers<[1], [0], [0], [1], [0, 0, 1, 1], [], []>} : vector<64x384xbf16>, vector<384x8xbf16>, vector<64x8xf32> -> vector<64x8xf32>
    %102 = arith.addf %90, %101 : vector<64x8xf32>
    %c0_43 = arith.constant 0 : index
    %c0_44 = arith.constant 0 : index
    %103 = vector.load %arg7[%c0_43, %c0_44] : memref<1x8xf32, #tpu.memory_space<vmem>>, vector<1x8xf32>
    %104 = vector.broadcast %103 : vector<1x8xf32> to vector<64x8xf32>
    %105 = arith.addf %102, %104 : vector<64x8xf32>
    %cst_45 = arith.constant 0.000000e+00 : f32
    %106 = vector.broadcast %cst_45 : f32 to vector<64x8xf32>
    %107 = arith.cmpf oge, %105, %106 : vector<64x8xf32>
    %108 = vector.broadcast %2 : f32 to vector<64x8xf32>
    %109 = arith.mulf %108, %105 : vector<64x8xf32>
    %110 = arith.select %107, %105, %109 : vector<64x8xi1>, vector<64x8xf32>
    %111 = arith.subf %110, %15 : vector<64x8xf32>
    %112 = arith.truncf %111 : vector<64x8xf32> to vector<64x8xbf16>
    %cst_46 = arith.constant 0.000000e+00 : bf16
    %113 = vector.broadcast %cst_46 : bf16 to vector<16x8xbf16>
    %114 = tpu.concatenate %113, %112, %113 in 0 : vector<16x8xbf16>, vector<64x8xbf16>, vector<16x8xbf16> -> vector<96x8xbf16>
    %115 = vector.extract_strided_slice %114 {offsets = [7, 0], sizes = [64, 8], strides = [1, 1]} : vector<96x8xbf16> to vector<64x8xbf16>
    %cst_47 = arith.constant 0.000000e+00 : bf16
    %116 = vector.broadcast %cst_47 : bf16 to vector<64x8xbf16>
    %117 = arith.select %19, %116, %115 : vector<64x8xi1>, vector<64x8xbf16>
    %118 = vector.extract_strided_slice %114 {offsets = [8, 0], sizes = [64, 8], strides = [1, 1]} : vector<96x8xbf16> to vector<64x8xbf16>
    %119 = vector.extract_strided_slice %114 {offsets = [9, 0], sizes = [64, 8], strides = [1, 1]} : vector<96x8xbf16> to vector<64x8xbf16>
    %cst_48 = arith.constant 0.000000e+00 : bf16
    %120 = vector.broadcast %cst_48 : bf16 to vector<64x8xbf16>
    %121 = arith.select %21, %120, %119 : vector<64x8xi1>, vector<64x8xbf16>
    %122 = vector.extract_strided_slice %114 {offsets = [15, 0], sizes = [64, 8], strides = [1, 1]} : vector<96x8xbf16> to vector<64x8xbf16>
    %cst_49 = arith.constant 0.000000e+00 : bf16
    %123 = vector.broadcast %cst_49 : bf16 to vector<64x8xbf16>
    %124 = arith.select %19, %123, %122 : vector<64x8xi1>, vector<64x8xbf16>
    %125 = vector.extract_strided_slice %114 {offsets = [16, 0], sizes = [64, 8], strides = [1, 1]} : vector<96x8xbf16> to vector<64x8xbf16>
    %126 = vector.extract_strided_slice %114 {offsets = [17, 0], sizes = [64, 8], strides = [1, 1]} : vector<96x8xbf16> to vector<64x8xbf16>
    %cst_50 = arith.constant 0.000000e+00 : bf16
    %127 = vector.broadcast %cst_50 : bf16 to vector<64x8xbf16>
    %128 = arith.select %21, %127, %126 : vector<64x8xi1>, vector<64x8xbf16>
    %129 = vector.extract_strided_slice %114 {offsets = [23, 0], sizes = [64, 8], strides = [1, 1]} : vector<96x8xbf16> to vector<64x8xbf16>
    %cst_51 = arith.constant 0.000000e+00 : bf16
    %130 = vector.broadcast %cst_51 : bf16 to vector<64x8xbf16>
    %131 = arith.select %19, %130, %129 : vector<64x8xi1>, vector<64x8xbf16>
    %132 = vector.extract_strided_slice %114 {offsets = [24, 0], sizes = [64, 8], strides = [1, 1]} : vector<96x8xbf16> to vector<64x8xbf16>
    %133 = vector.extract_strided_slice %114 {offsets = [25, 0], sizes = [64, 8], strides = [1, 1]} : vector<96x8xbf16> to vector<64x8xbf16>
    %cst_52 = arith.constant 0.000000e+00 : bf16
    %134 = vector.broadcast %cst_52 : bf16 to vector<64x8xbf16>
    %135 = arith.select %21, %134, %133 : vector<64x8xi1>, vector<64x8xbf16>
    %136 = tpu.concatenate %117, %118, %121, %124, %125, %128, %131, %132, %135 in 1 : vector<64x8xbf16>, vector<64x8xbf16>, vector<64x8xbf16>, vector<64x8xbf16>, vector<64x8xbf16>, vector<64x8xbf16>, vector<64x8xbf16>, vector<64x8xbf16>, vector<64x8xbf16> -> vector<64x72xbf16>
    %c0_53 = arith.constant 0 : index
    %c0_54 = arith.constant 0 : index
    %137 = vector.load %arg8[%c0_53, %c0_54] : memref<72x128xbf16, #tpu.memory_space<vmem>>, vector<72x128xbf16>
    %cst_55 = arith.constant dense<0.000000e+00> : vector<64x128xf32>
    %138 = tpu.matmul %136, %137, %cst_55 {dimension_numbers = #tpu.dot_dimension_numbers<[1], [0], [0], [1], [0, 0, 1, 1], [], []>} : vector<64x72xbf16>, vector<72x128xbf16>, vector<64x128xf32> -> vector<64x128xf32>
    %c0_56 = arith.constant 0 : index
    %c0_57 = arith.constant 0 : index
    %139 = vector.load %arg9[%c0_56, %c0_57] : memref<1x128xf32, #tpu.memory_space<vmem>>, vector<1x128xf32>
    %140 = vector.broadcast %139 : vector<1x128xf32> to vector<64x128xf32>
    %141 = arith.addf %138, %140 : vector<64x128xf32>
    %cst_58 = arith.constant 0.000000e+00 : f32
    %142 = vector.broadcast %cst_58 : f32 to vector<64x128xf32>
    %143 = arith.cmpf oge, %141, %142 : vector<64x128xf32>
    %144 = vector.broadcast %3 : f32 to vector<64x128xf32>
    %145 = arith.mulf %144, %141 : vector<64x128xf32>
    %146 = arith.select %143, %141, %145 : vector<64x128xi1>, vector<64x128xf32>
    %147 = arith.extf %57 : vector<64x128xbf16> to vector<64x128xf32>
    %148 = arith.addf %146, %147 : vector<64x128xf32>
    %c0_59 = arith.constant 0 : index
    %c0_60 = arith.constant 0 : index
    %c0_61 = arith.constant 0 : index
    %149 = vector.load %arg11[%c0_59, %c0_60, %c0_61] : memref<1x64x128xf32, #tpu.memory_space<vmem>>, vector<1x64x128xf32>
    %150 = vector.shape_cast %149 : vector<1x64x128xf32> to vector<64x128xf32>
    %151 = vector.shape_cast %148 : vector<64x128xf32> to vector<1x64x128xf32>
    tpu.vector_store %arg11[%c0_59, %c0_60, %c0_61], %151 {strides = array<i32>} : memref<1x64x128xf32, #tpu.memory_space<vmem>>, vector<1x64x128xf32>,
    return
  }
  func.func @transform_0(%arg0: i32) -> (i32, i32, i32) {
    %c0_i32 = arith.constant 0 : i32
    %c0_i32_0 = arith.constant 0 : i32
    %c0_i32_1 = arith.constant 0 : i32
    return %arg0, %c0_i32, %c0_i32_0 : i32, i32, i32
  }
  func.func @transform_1(%arg0: i32) -> (i32, i32) {
    %c0_i32 = arith.constant 0 : i32
    %c0_i32_0 = arith.constant 0 : i32
    %c0_i32_1 = arith.constant 0 : i32
    return %c0_i32, %c0_i32_0 : i32, i32
  }
  func.func @transform_2(%arg0: i32) -> (i32, i32) {
    %c0_i32 = arith.constant 0 : i32
    %c0_i32_0 = arith.constant 0 : i32
    %c0_i32_1 = arith.constant 0 : i32
    return %c0_i32, %c0_i32_0 : i32, i32
  }
  func.func @transform_3(%arg0: i32) -> (i32, i32) {
    %c0_i32 = arith.constant 0 : i32
    %c0_i32_0 = arith.constant 0 : i32
    %c0_i32_1 = arith.constant 0 : i32
    return %c0_i32, %c0_i32_0 : i32, i32
  }
  func.func @transform_4(%arg0: i32) -> (i32, i32) {
    %c0_i32 = arith.constant 0 : i32
    %c0_i32_0 = arith.constant 0 : i32
    %c0_i32_1 = arith.constant 0 : i32
    return %c0_i32, %c0_i32_0 : i32, i32
  }
  func.func @transform_5(%arg0: i32) -> (i32, i32, i32) {
    %c0_i32 = arith.constant 0 : i32
    %c0_i32_0 = arith.constant 0 : i32
    %c0_i32_1 = arith.constant 0 : i32
    %c0_i32_2 = arith.constant 0 : i32
    return %c0_i32, %c0_i32_0, %c0_i32_1 : i32, i32, i32
  }
  func.func @transform_6(%arg0: i32) -> (i32, i32) {
    %c0_i32 = arith.constant 0 : i32
    %c0_i32_0 = arith.constant 0 : i32
    %c0_i32_1 = arith.constant 0 : i32
    return %c0_i32, %c0_i32_0 : i32, i32
  }
  func.func @transform_7(%arg0: i32) -> (i32, i32) {
    %c0_i32 = arith.constant 0 : i32
    %c0_i32_0 = arith.constant 0 : i32
    %c0_i32_1 = arith.constant 0 : i32
    return %c0_i32, %c0_i32_0 : i32, i32
  }
  func.func @transform_8(%arg0: i32) -> (i32, i32) {
    %c0_i32 = arith.constant 0 : i32
    %c0_i32_0 = arith.constant 0 : i32
    %c0_i32_1 = arith.constant 0 : i32
    return %c0_i32, %c0_i32_0 : i32, i32
  }
  func.func @transform_9(%arg0: i32) -> i32 {
    %c0_i32 = arith.constant 0 : i32
    %c0_i32_0 = arith.constant 0 : i32
    return %c0_i32 : i32
  }
  func.func @transform_10(%arg0: i32) -> (i32, i32, i32) {
    %c0_i32 = arith.constant 0 : i32
    %c0_i32_0 = arith.constant 0 : i32
    %c0_i32_1 = arith.constant 0 : i32
    return %arg0, %c0_i32, %c0_i32_0 : i32, i32, i32
  }
}

</mosaic_0001>

<llo_original>
// kernel: tile.13
$region0: #{tile.13}
  #allocation0 [shape = 's32[1]{0}', space=sflag, size = 0x4, scoped, tag = 'scoped memory for tile.13']
  %s0 = inlined_call_operand.vmem [shape: f32[8], index: 0, kind: input, shape index: {}]
  %s1 = inlined_call_operand.vmem [shape: f32[16,8], index: 1, kind: output, shape index: {}]
  // Predicated region
  $region2: #{tile.13} parent=0 // pred_check
    _
  $region3: #{tile.13} parent=0 // pred_check_branch
    %3 = sbr.rel (0) target = $region5
  $region4: #{tile.13} parent=0 // pred_region
    _
  $region5: #{tile.13} parent=0 // pred_fallthru
    _
  %v4 = vld [vmem:[%s0] ss:$0 sm:$0xff]
  %5 = vst [vmem:[%s1] sm:$0xff] %v4
  %s6 = scalar_lea.vmem %s1, 8
  %7 = vst [vmem:[%s6] sm:$0xff] %v4

// kernel: tile.14
$region0: #{tile.14}
  %s0 = inlined_call_operand.vmem [shape: f32[16,8], index: 0, kind: input, shape index: {}]
  %s1 = inlined_call_operand.vmem [shape: f32[1,128], index: 1, kind: output, shape index: {}]
  $region1: #{tile.14} parent=0
    #allocation0 [shape = 'u8[4096]{0}', space=vmem, size = 0x1000, scoped, tag = 'scoped mem for output reshape']
    %v2 = vld [vmem:[%s0] sm:$0x1]
    %vm3 = vcmask 64512
    %4 = vst.msk [vmem:[#allocation0] sm:$0x1] %vm3, %v2
    %s5 = scalar_lea.vmem %s0, 15
    %v6 = vld [vmem:[%s5] sm:$0x1]
    %7 = vrot.lane.b32.xlu0 %v6, 120
    %v8 = vpop.permute.xlu0 %7
    %vm9 = vcmask 1048512
    %10 = vst.msk [vmem:[#allocation0] sm:$0x1] %vm9, %v8
    %s11 = scalar_lea.vmem %s0, 14
    %v12 = vld [vmem:[%s11] sm:$0x1]
    %13 = vrot.lane.b32.xlu0 %v12, 112
    %v14 = vpop.permute.xlu0 %13
    %vm15 = vcmask 982912
    %16 = vst.msk [vmem:[#allocation0] sm:$0x1] %vm15, %v14
    %s17 = scalar_lea.vmem %s0, 13
    %v18 = vld [vmem:[%s17] sm:$0x1]
    %19 = vrot.lane.b32.xlu0 %v18, 104
    %v20 = vpop.permute.xlu0 %19
    %vm21 = vcmask 917312
    %22 = vst.msk [vmem:[#allocation0] sm:$0x1] %vm21, %v20
    %s23 = scalar_lea.vmem %s0, 12
    %v24 = vld [vmem:[%s23] sm:$0x1]
    %25 = vrot.lane.b32.xlu0 %v24, 96
    %v26 = vpop.permute.xlu0 %25
    %vm27 = vcmask 851712
    %28 = vst.msk [vmem:[#allocation0] sm:$0x1] %vm27, %v26
    %s29 = scalar_lea.vmem %s0, 11
    %v30 = vld [vmem:[%s29] sm:$0x1]
    %31 = vrot.lane.b32.xlu0 %v30, 88
    %v32 = vpop.permute.xlu0 %31
    %vm33 = vcmask 786112
    %34 = vst.msk [vmem:[#allocation0] sm:$0x1] %vm33, %v32
    %s35 = scalar_lea.vmem %s0, 10
    %v36 = vld [vmem:[%s35] sm:$0x1]
    %37 = vrot.lane.b32.xlu0 %v36, 80
    %v38 = vpop.permute.xlu0 %37
    %vm39 = vcmask 720512
    %40 = vst.msk [vmem:[#allocation0] sm:$0x1] %vm39, %v38
    %s41 = scalar_lea.vmem %s0, 9
    %v42 = vld [vmem:[%s41] sm:$0x1]
    %43 = vrot.lane.b32.xlu0 %v42, 72
    %v44 = vpop.permute.xlu0 %43
    %vm45 = vcmask 654912
    %46 = vst.msk [vmem:[#allocation0] sm:$0x1] %vm45, %v44
    %s47 = scalar_lea.vmem %s0, 8
    %v48 = vld [vmem:[%s47] sm:$0x1]
    %49 = vrot.lane.b32.xlu0 %v48, 64
    %v50 = vpop.permute.xlu0 %49
    %vm51 = vcmask 589312
    %52 = vst.msk [vmem:[#allocation0] sm:$0x1] %vm51, %v50
    %s53 = scalar_lea.vmem %s0, 7
    %v54 = vld [vmem:[%s53] sm:$0x1]
    %55 = vrot.lane.b32.xlu0 %v54, 56
    %v56 = vpop.permute.xlu0 %55
    %vm57 = vcmask 523712
    %58 = vst.msk [vmem:[#allocation0] sm:$0x1] %vm57, %v56
    %s59 = scalar_lea.vmem %s0, 6
    %v60 = vld [vmem:[%s59] sm:$0x1]
    %61 = vrot.lane.b32.xlu0 %v60, 48
    %v62 = vpop.permute.xlu0 %61
    %vm63 = vcmask 458112
    %64 = vst.msk [vmem:[#allocation0] sm:$0x1] %vm63, %v62
    %s65 = scalar_lea.vmem %s0, 5
    %v66 = vld [vmem:[%s65] sm:$0x1]
    %67 = vrot.lane.b32.xlu0 %v66, 40
    %v68 = vpop.permute.xlu0 %67
    %vm69 = vcmask 392512
    %70 = vst.msk [vmem:[#allocation0] sm:$0x1] %vm69, %v68
    %s71 = scalar_lea.vmem %s0, 4
    %v72 = vld [vmem:[%s71] sm:$0x1]
    %73 = vrot.lane.b32.xlu0 %v72, 32
    %v74 = vpop.permute.xlu0 %73
    %vm75 = vcmask 326912
    %76 = vst.msk [vmem:[#allocation0] sm:$0x1] %vm75, %v74
    %s77 = scalar_lea.vmem %s0, 3
    %v78 = vld [vmem:[%s77] sm:$0x1]
    %79 = vrot.lane.b32.xlu0 %v78, 24
    %v80 = vpop.permute.xlu0 %79
    %vm81 = vcmask 261312
    %82 = vst.msk [vmem:[#allocation0] sm:$0x1] %vm81, %v80
    %s83 = scalar_lea.vmem %s0, 2
    %v84 = vld [vmem:[%s83] sm:$0x1]
    %85 = vrot.lane.b32.xlu0 %v84, 16
    %v86 = vpop.permute.xlu0 %85
    %vm87 = vcmask 195712
    %88 = vst.msk [vmem:[#allocation0] sm:$0x1] %vm87, %v86
    %s89 = scalar_lea.vmem %s0, 1
    %v90 = vld [vmem:[%s89] sm:$0x1]
    %91 = vrot.lane.b32.xlu0 %v90, 8
    %v92 = vpop.permute.xlu0 %91
    %vm93 = vcmask 130112
    %94 = vst.msk [vmem:[#allocation0] sm:$0x1] %vm93, %v92
    %s96 = sshllo.u32 0, 1
    %v98 = vld [vmem:[#allocation0] sm:%s96]
    %s99 = sshllo.u32 0, 1
    %100 = vst [vmem:[%s1] sm:%s99] %v98

// kernel: rb2dbpn_forward.1
$region0: #{rb2dbpn_forward.1}
  #allocation0 [shape = 'u32[]', space=smem, size = 0x4, offset = 0x4, fixed_abs, tag = 'smem constant byte address 0x4 - core index']
  #allocation1 [shape = 'u32[144,128]{1,0:T(1,128)}', space=vmem, size = 0x12000, scoped, tag = 'internal scratch']
  %s0 = inlined_call_operand.vmem [shape: bf16[2,64,4], index: 0, kind: input, shape index: {}]
  %s1 = inlined_call_operand.vmem [shape: bf16[4,8], index: 1, kind: input, shape index: {}]
  %s2 = inlined_call_operand.vmem [shape: f32[1,8], index: 2, kind: input, shape index: {}]
  %s3 = inlined_call_operand.vmem [shape: bf16[72,128], index: 3, kind: input, shape index: {}]
  %s4 = inlined_call_operand.vmem [shape: f32[1,128], index: 4, kind: input, shape index: {}]
  %s5 = inlined_call_operand.vmem [shape: bf16[3,384,8], index: 5, kind: input, shape index: {}]
  %s6 = inlined_call_operand.vmem [shape: f32[1,8], index: 6, kind: input, shape index: {}]
  %s7 = inlined_call_operand.vmem [shape: bf16[72,128], index: 7, kind: input, shape index: {}]
  %s8 = inlined_call_operand.vmem [shape: f32[1,128], index: 8, kind: input, shape index: {}]
  %s9 = inlined_call_operand.vmem [shape: f32[4], index: 9, kind: input, shape index: {}]
  %s10 = inlined_call_operand.vmem [shape: f32[2,64,128], index: 10, kind: output, shape index: {}]
  %s11 = sld [smem:[#allocation0]]
  $region77: #{rb2dbpn_forward.1} parent=0
    _
  %s13 = ssub.s32 1, %s11
  %s14 = scalar_select 0, %s13, %s11
  $region1: #{rb2dbpn_forward.1} parent=0
    #allocation2 [shape = 'u8[512]{0}', space=smem, size = 0x200, scoped, tag = 'input window, operand 9, single buffered']
    #allocation3 [shape = 's32[2]{0}', space=sflag, size = 0x8, scoped, tag = 'scoped memory for rb2dbpn_forward.1']
    %15 = vsyncpa [#allocation3], 0
    loop: start=0, step=1, limit=4
    $region2: #{rb2dbpn_forward.1} parent=1 // loop_pre_header
      _
    $region3: #{rb2dbpn_forward.1} parent=1 // loop_header
      %s17 = sphi 0, %s21
      %p18 = scmp.ge.s32.totalorder %s17, 4
      %s27 = sphi 0, %s29
      %s30 = sphi 0, %s27
      %s31 = sphi 0, %s30
      %s47 = sphi 0, %s31
      %s51 = sphi 0, %s51
      %s53 = sphi 0, %s51
      %s54 = sphi 0, %s53
      %s68 = sphi 0, %s54
      %s72 = sphi 0, %s72
      %s74 = sphi 0, %s72
      %s75 = sphi 0, %s74
      %s89 = sphi 0, %s75
      %s93 = sphi 0, %s93
      %s95 = sphi 0, %s93
      %s96 = sphi 0, %s95
      %s110 = sphi 0, %s96
      %s114 = sphi 0, %s114
      %s116 = sphi 0, %s114
      %s117 = sphi 0, %s116
      %s131 = sphi 0, %s117
      %s135 = sphi 0, %s135
      %s137 = sphi 0, %s135
      %s138 = sphi 0, %s137
      %s152 = sphi 0, %s138
      %s156 = sphi 0, %s156
      %s158 = sphi 0, %s156
      %s159 = sphi 0, %s158
      %s173 = sphi 0, %s159
      %s177 = sphi 0, %s177
      %s179 = sphi 0, %s177
      %s180 = sphi 0, %s179
      %s194 = sphi 0, %s180
      %s198 = sphi 0, %s198
      %s200 = sphi 0, %s198
      %s201 = sphi 0, %s200
      %s215 = sphi 0, %s201
      %s219 = sphi 0, %s219
      %s221 = sphi 0, %s219
      %s222 = sphi 0, %s221
      %s236 = sphi 0, %s222
      %s242 = sphi 0, %s244
      %s245 = sphi 0, %s242
      %s246 = sphi 0, %s245
      %s262 = sphi 0, %s246
    $region4: #{rb2dbpn_forward.1} parent=1 // loop_header_branch
      %20 = sbr.rel (%p18) target = $region8
    $region5: #{rb2dbpn_forward.1} parent=1 // loop_body
      %s22 = ssub.s32 %s17, 1
      %s23 = ssub.s32 %s17, 2
      %s24 = sadd.s32 %s17, 1
      %s25 = ssub.s32 %s17, %s24
      %p26 = scmp.eq.s32.totalorder %s25, 0
      %s28 = sadd.s32 %s27, 1
      %s29 = scalar_select %p26, %s27, %s28
      %p32 = pneg %p26
      %p33 = scmp.eq.s32.totalorder %s17, 1
      %p34 = por %p32, %p33
      %p35 = scmp.ne.s32.totalorder %s27, %s30
      %p36 = scmp.eq.s32.totalorder %s17, 0
      %p37 = por %p35, %p36
      %p38 = scmp.ne.s32.totalorder %s27, %s30
      %p39 = scmp.eq.s32.totalorder %s22, 1
      %p40 = por %p38, %p39
      %p41 = scmp.ne.s32.totalorder %s30, %s31
      %p42 = scmp.eq.s32.totalorder %s22, 0
      %p43 = por %p41, %p42
      %p44 = scmp.ne.s32.totalorder %s30, %s31
      %p45 = scmp.eq.s32.totalorder %s23, 1
      %p46 = por %p44, %p45
      %p48 = scmp.ne.s32.totalorder %s31, %s47
      %p49 = scmp.eq.s32.totalorder %s23, 0
      %p50 = por %p48, %p49
      %s52 = sadd.s32 %s51, 1
      %p55 = scmp.eq.s32.totalorder %s17, 1
      %p56 = scmp.ne.s32.totalorder %s51, %s53
      %p57 = scmp.eq.s32.totalorder %s17, 0
      %p58 = por %p56, %p57
      %p59 = scmp.ne.s32.totalorder %s51, %s53
      %p60 = scmp.eq.s32.totalorder %s22, 1
      %p61 = por %p59, %p60
      %p62 = scmp.ne.s32.totalorder %s53, %s54
      %p63 = scmp.eq.s32.totalorder %s22, 0
      %p64 = por %p62, %p63
      %p65 = scmp.ne.s32.totalorder %s53, %s54
      %p66 = scmp.eq.s32.totalorder %s23, 1
      %p67 = por %p65, %p66
      %p69 = scmp.ne.s32.totalorder %s54, %s68
      %p70 = scmp.eq.s32.totalorder %s23, 0
      %p71 = por %p69, %p70
      %s73 = sadd.s32 %s72, 1
      %p76 = scmp.eq.s32.totalorder %s17, 1
      %p77 = scmp.ne.s32.totalorder %s72, %s74
      %p78 = scmp.eq.s32.totalorder %s17, 0
      %p79 = por %p77, %p78
      %p80 = scmp.ne.s32.totalorder %s72, %s74
      %p81 = scmp.eq.s32.totalorder %s22, 1
      %p82 = por %p80, %p81
      %p83 = scmp.ne.s32.totalorder %s74, %s75
      %p84 = scmp.eq.s32.totalorder %s22, 0
      %p85 = por %p83, %p84
      %p86 = scmp.ne.s32.totalorder %s74, %s75
      %p87 = scmp.eq.s32.totalorder %s23, 1
      %p88 = por %p86, %p87
      %p90 = scmp.ne.s32.totalorder %s75, %s89
      %p91 = scmp.eq.s32.totalorder %s23, 0
      %p92 = por %p90, %p91
      %s94 = sadd.s32 %s93, 1
      %p97 = scmp.eq.s32.totalorder %s17, 1
      %p98 = scmp.ne.s32.totalorder %s93, %s95
      %p99 = scmp.eq.s32.totalorder %s17, 0
      %p100 = por %p98, %p99
      %p101 = scmp.ne.s32.totalorder %s93, %s95
      %p102 = scmp.eq.s32.totalorder %s22, 1
      %p103 = por %p101, %p102
      %p104 = scmp.ne.s32.totalorder %s95, %s96
      %p105 = scmp.eq.s32.totalorder %s22, 0
      %p106 = por %p104, %p105
      %p107 = scmp.ne.s32.totalorder %s95, %s96
      %p108 = scmp.eq.s32.totalorder %s23, 1
      %p109 = por %p107, %p108
      %p111 = scmp.ne.s32.totalorder %s96, %s110
      %p112 = scmp.eq.s32.totalorder %s23, 0
      %p113 = por %p111, %p112
      %s115 = sadd.s32 %s114, 1
      %p118 = scmp.eq.s32.totalorder %s17, 1
      %p119 = scmp.ne.s32.totalorder %s114, %s116
      %p120 = scmp.eq.s32.totalorder %s17, 0
      %p121 = por %p119, %p120
      %p122 = scmp.ne.s32.totalorder %s114, %s116
      %p123 = scmp.eq.s32.totalorder %s22, 1
      %p124 = por %p122, %p123
      %p125 = scmp.ne.s32.totalorder %s116, %s117
      %p126 = scmp.eq.s32.totalorder %s22, 0
      %p127 = por %p125, %p126
      %p128 = scmp.ne.s32.totalorder %s116, %s117
      %p129 = scmp.eq.s32.totalorder %s23, 1
      %p130 = por %p128, %p129
      %p132 = scmp.ne.s32.totalorder %s117, %s131
      %p133 = scmp.eq.s32.totalorder %s23, 0
      %p134 = por %p132, %p133
      %s136 = sadd.s32 %s135, 1
      %p139 = scmp.eq.s32.totalorder %s17, 1
      %p140 = scmp.ne.s32.totalorder %s135, %s137
      %p141 = scmp.eq.s32.totalorder %s17, 0
      %p142 = por %p140, %p141
      %p143 = scmp.ne.s32.totalorder %s135, %s137
      %p144 = scmp.eq.s32.totalorder %s22, 1
      %p145 = por %p143, %p144
      %p146 = scmp.ne.s32.totalorder %s137, %s138
      %p147 = scmp.eq.s32.totalorder %s22, 0
      %p148 = por %p146, %p147
      %p149 = scmp.ne.s32.totalorder %s137, %s138
      %p150 = scmp.eq.s32.totalorder %s23, 1
      %p151 = por %p149, %p150
      %p153 = scmp.ne.s32.totalorder %s138, %s152
      %p154 = scmp.eq.s32.totalorder %s23, 0
      %p155 = por %p153, %p154
      %s157 = sadd.s32 %s156, 1
      %p160 = scmp.eq.s32.totalorder %s17, 1
      %p161 = scmp.ne.s32.totalorder %s156, %s158
      %p162 = scmp.eq.s32.totalorder %s17, 0
      %p163 = por %p161, %p162
      %p164 = scmp.ne.s32.totalorder %s156, %s158
      %p165 = scmp.eq.s32.totalorder %s22, 1
      %p166 = por %p164, %p165
      %p167 = scmp.ne.s32.totalorder %s158, %s159
      %p168 = scmp.eq.s32.totalorder %s22, 0
      %p169 = por %p167, %p168
      %p170 = scmp.ne.s32.totalorder %s158, %s159
      %p171 = scmp.eq.s32.totalorder %s23, 1
      %p172 = por %p170, %p171
      %p174 = scmp.ne.s32.totalorder %s159, %s173
      %p175 = scmp.eq.s32.totalorder %s23, 0
      %p176 = por %p174, %p175
      %s178 = sadd.s32 %s177, 1
      %p181 = scmp.eq.s32.totalorder %s17, 1
      %p182 = scmp.ne.s32.totalorder %s177, %s179
      %p183 = scmp.eq.s32.totalorder %s17, 0
      %p184 = por %p182, %p183
      %p185 = scmp.ne.s32.totalorder %s177, %s179
      %p186 = scmp.eq.s32.totalorder %s22, 1
      %p187 = por %p185, %p186
      %p188 = scmp.ne.s32.totalorder %s179, %s180
      %p189 = scmp.eq.s32.totalorder %s22, 0
      %p190 = por %p188, %p189
      %p191 = scmp.ne.s32.totalorder %s179, %s180
      %p192 = scmp.eq.s32.totalorder %s23, 1
      %p193 = por %p191, %p192
      %p195 = scmp.ne.s32.totalorder %s180, %s194
      %p196 = scmp.eq.s32.totalorder %s23, 0
      %p197 = por %p195, %p196
      %s199 = sadd.s32 %s198, 1
      %p202 = scmp.eq.s32.totalorder %s17, 1
      %p203 = scmp.ne.s32.totalorder %s198, %s200
      %p204 = scmp.eq.s32.totalorder %s17, 0
      %p205 = por %p203, %p204
      %p206 = scmp.ne.s32.totalorder %s198, %s200
      %p207 = scmp.eq.s32.totalorder %s22, 1
      %p208 = por %p206, %p207
      %p209 = scmp.ne.s32.totalorder %s200, %s201
      %p210 = scmp.eq.s32.totalorder %s22, 0
      %p211 = por %p209, %p210
      %p212 = scmp.ne.s32.totalorder %s200, %s201
      %p213 = scmp.eq.s32.totalorder %s23, 1
      %p214 = por %p212, %p213
      %p216 = scmp.ne.s32.totalorder %s201, %s215
      %p217 = scmp.eq.s32.totalorder %s23, 0
      %p218 = por %p216, %p217
      %s220 = sadd.s32 %s219, 1
      %p223 = scmp.eq.s32.totalorder %s17, 1
      %p224 = scmp.ne.s32.totalorder %s219, %s221
      %p225 = scmp.eq.s32.totalorder %s17, 0
      %p226 = por %p224, %p225
      %p227 = scmp.ne.s32.totalorder %s219, %s221
      %p228 = scmp.eq.s32.totalorder %s22, 1
      %p229 = por %p227, %p228
      %p230 = scmp.ne.s32.totalorder %s221, %s222
      %p231 = scmp.eq.s32.totalorder %s22, 0
      %p232 = por %p230, %p231
      %p233 = scmp.ne.s32.totalorder %s221, %s222
      %p234 = scmp.eq.s32.totalorder %s23, 1
      %p235 = por %p233, %p234
      %p237 = scmp.ne.s32.totalorder %s222, %s236
      %p238 = scmp.eq.s32.totalorder %s23, 0
      %p239 = por %p237, %p238
      %s240 = ssub.s32 %s17, %s24
      %p241 = scmp.eq.s32.totalorder %s240, 0
      %s243 = sadd.s32 %s242, 1
      %s244 = scalar_select %p241, %s242, %s243
      %p247 = pneg %p241
      %p248 = scmp.eq.s32.totalorder %s17, 1
      %p249 = por %p247, %p248
      %p250 = scmp.ne.s32.totalorder %s242, %s245
      %p251 = scmp.eq.s32.totalorder %s17, 0
      %p252 = por %p250, %p251
      %p253 = scmp.ne.s32.totalorder %s242, %s245
      %p254 = scmp.eq.s32.totalorder %s22, 1
      %p255 = por %p253, %p254
      %p256 = scmp.ne.s32.totalorder %s245, %s246
      %p257 = scmp.eq.s32.totalorder %s22, 0
      %p258 = por %p256, %p257
      %p259 = scmp.ne.s32.totalorder %s245, %s246
      %p260 = scmp.eq.s32.totalorder %s23, 1
      %p261 = por %p259, %p260
      %p263 = scmp.ne.s32.totalorder %s246, %s262
      %p264 = scmp.eq.s32.totalorder %s23, 0
      %p265 = por %p263, %p264
      %p266 = scmp.le.s32.totalorder 1, %s17
      %p267 = scmp.lt.s32.totalorder %s17, 3
      %p268 = pnand %p266, %p267
      %p269 = pneg %p268
      // Predicated region
      $region9: #{rb2dbpn_forward.1} parent=5 // pred_check
        _
      $region10: #{rb2dbpn_forward.1} parent=5 // pred_check_branch
        %271 = sbr.rel (%p268) target = $region12
      $region11: #{rb2dbpn_forward.1} parent=5 // pred_region
        %s272 = ssub.s32 %s17, 1
        // Predicated region
        $region13: #{rb2dbpn_forward.1} parent=11 // pred_check
          %p273 = pneg %p64
        $region14: #{rb2dbpn_forward.1} parent=11 // pred_check_branch
          %275 = sbr.rel (%p273) target = $region16
        $region15: #{rb2dbpn_forward.1} parent=11 // pred_region
          _
        $region16: #{rb2dbpn_forward.1} parent=11 // pred_fallthru
          _
        // Predicated region
        $region17: #{rb2dbpn_forward.1} parent=11 // pred_check
          %p276 = pneg %p85
        $region18: #{rb2dbpn_forward.1} parent=11 // pred_check_branch
          %278 = sbr.rel (%p276) target = $region20
        $region19: #{rb2dbpn_forward.1} parent=11 // pred_region
          _
        $region20: #{rb2dbpn_forward.1} parent=11 // pred_fallthru
          _
        // Predicated region
        $region21: #{rb2dbpn_forward.1} parent=11 // pred_check
          %p279 = pneg %p106
        $region22: #{rb2dbpn_forward.1} parent=11 // pred_check_branch
          %281 = sbr.rel (%p279) target = $region24
        $region23: #{rb2dbpn_forward.1} parent=11 // pred_region
          _
        $region24: #{rb2dbpn_forward.1} parent=11 // pred_fallthru
          _
        // Predicated region
        $region25: #{rb2dbpn_forward.1} parent=11 // pred_check
          %p282 = pneg %p127
        $region26: #{rb2dbpn_forward.1} parent=11 // pred_check_branch
          %284 = sbr.rel (%p282) target = $region28
        $region27: #{rb2dbpn_forward.1} parent=11 // pred_region
          _
        $region28: #{rb2dbpn_forward.1} parent=11 // pred_fallthru
          _
        // Predicated region
        $region29: #{rb2dbpn_forward.1} parent=11 // pred_check
          %p285 = pneg %p148
        $region30: #{rb2dbpn_forward.1} parent=11 // pred_check_branch
          %287 = sbr.rel (%p285) target = $region32
        $region31: #{rb2dbpn_forward.1} parent=11 // pred_region
          _
        $region32: #{rb2dbpn_forward.1} parent=11 // pred_fallthru
          _
        // Predicated region
        $region33: #{rb2dbpn_forward.1} parent=11 // pred_check
          %p288 = pneg %p169
        $region34: #{rb2dbpn_forward.1} parent=11 // pred_check_branch
          %290 = sbr.rel (%p288) target = $region36
        $region35: #{rb2dbpn_forward.1} parent=11 // pred_region
          _
        $region36: #{rb2dbpn_forward.1} parent=11 // pred_fallthru
          _
        // Predicated region
        $region37: #{rb2dbpn_forward.1} parent=11 // pred_check
          %p291 = pneg %p190
        $region38: #{rb2dbpn_forward.1} parent=11 // pred_check_branch
          %293 = sbr.rel (%p291) target = $region40
        $region39: #{rb2dbpn_forward.1} parent=11 // pred_region
          _
        $region40: #{rb2dbpn_forward.1} parent=11 // pred_fallthru
          _
        // Predicated region
        $region41: #{rb2dbpn_forward.1} parent=11 // pred_check
          %p294 = pneg %p211
        $region42: #{rb2dbpn_forward.1} parent=11 // pred_check_branch
          %296 = sbr.rel (%p294) target = $region44
        $region43: #{rb2dbpn_forward.1} parent=11 // pred_region
          _
        $region44: #{rb2dbpn_forward.1} parent=11 // pred_fallthru
          _
        // Predicated region
        $region45: #{rb2dbpn_forward.1} parent=11 // pred_check
          %p297 = pneg %p232
        $region46: #{rb2dbpn_forward.1} parent=11 // pred_check_branch
          %299 = sbr.rel (%p297) target = $region48
        $region47: #{rb2dbpn_forward.1} parent=11 // pred_region
          %s301 = ssub.s32 16, 16
          %302 = vsyncadd [#allocation3], %s301
          %s304 = sshll.u32 %s9, 4
          %s305 = int_to_ptr.vmem [resolvable:$true] %s304
          %307 = dma.vmem_to_smem %s305, 16, [#allocation2], [#allocation3]
        $region48: #{rb2dbpn_forward.1} parent=11 // pred_fallthru
          _
      $region12: #{rb2dbpn_forward.1} parent=5 // pred_fallthru
        _
      %p308 = scmp.lt.s32.totalorder %s17, 2
      // Predicated region
      $region49: #{rb2dbpn_forward.1} parent=5 // pred_check
        %p309 = pneg %p308
      $region50: #{rb2dbpn_forward.1} parent=5 // pred_check_branch
        %311 = sbr.rel (%p309) target = $region52
      $region51: #{rb2dbpn_forward.1} parent=5 // pred_region
        // Predicated region
        $region53: #{rb2dbpn_forward.1} parent=51 // pred_check
          %p312 = pneg %p37
        $region54: #{rb2dbpn_forward.1} parent=51 // pred_check_branch
          %314 = sbr.rel (%p312) target = $region56
        $region55: #{rb2dbpn_forward.1} parent=51 // pred_region
          %p315 = scmp.lt.s32.totalorder %s17, 1
          %s316 = scalar_select %p315, %s17, 1
          %s317 = smul.addr %s316, 8
          %s318 = smul.addr %s317, 4
          %s319 = scalar_lea.vmem %s0, %s318
        $region56: #{rb2dbpn_forward.1} parent=51 // pred_fallthru
          _
      $region52: #{rb2dbpn_forward.1} parent=5 // pred_fallthru
        _
      %p320 = scmp.le.s32.totalorder 1, %s17
      %p321 = scmp.lt.s32.totalorder %s17, 3
      %p322 = pnand %p320, %p321
      %p323 = pneg %p322
      // Predicated region
      $region57: #{rb2dbpn_forward.1} parent=5 // pred_check
        _
      $region58: #{rb2dbpn_forward.1} parent=5 // pred_check_branch
        %325 = sbr.rel (%p322) target = $region60
      $region59: #{rb2dbpn_forward.1} parent=5 // pred_region
        %s326 = ssub.s32 %s17, 1
        // Predicated region
        $region61: #{rb2dbpn_forward.1} parent=59 // pred_check
          %p327 = pneg %p232
        $region62: #{rb2dbpn_forward.1} parent=59 // pred_check_branch
          %329 = sbr.rel (%p327) target = $region64
        $region63: #{rb2dbpn_forward.1} parent=59 // pred_region
          %330 = dma.done [#allocation3], 16
        $region64: #{rb2dbpn_forward.1} parent=59 // pred_fallthru
          _
        %331 = sfence
        %p332 = scmp.lt.s32.totalorder %s22, 1
        %s333 = scalar_select %p332, %s22, 1
        %s334 = smul.addr %s333, 8
        %s335 = smul.addr %s334, 4
        %s336 = scalar_lea.vmem %s0, %s335
        %p337 = pneg %p43
        %p338 = pneg %p40
        %p339 = pneg %p64
        %p340 = pneg %p61
        %p341 = pneg %p85
        %p342 = pneg %p82
        %p343 = pneg %p106
        %p344 = pneg %p103
        %p345 = pneg %p127
        %p346 = pneg %p124
        %p347 = pneg %p148
        %p348 = pneg %p145
        %p349 = pneg %p169
        %p350 = pneg %p166
        %p351 = pneg %p190
        %p352 = pneg %p187
        %p353 = pneg %p211
        %p354 = pneg %p208
        %p355 = pneg %p232
        %p356 = pneg %p229
        %p357 = pneg %p258
        %p358 = pneg %p255
        %p359 = scmp.lt.s32.totalorder %s22, 1
        %s360 = scalar_select %p359, %s22, 1
        %s361 = smul.addr %s360, 8
        %s362 = smul.addr %s361, 8
        %s363 = scalar_lea.vmem %s10, %s362
        %p364 = scmp.lt.s32.totalorder %s22, 1
        %s365 = scalar_select %p364, %s22, 1
        %s366 = smul.addr %s365, 8
        %s367 = smul.addr %s366, 4
        %s368 = scalar_lea.vmem %s0, %s367
        %p369 = scmp.lt.s32.totalorder %s22, 1
        %s370 = scalar_select %p369, %s22, 1
        %s371 = smul.addr %s370, 8
        %s372 = smul.addr %s371, 8
        %s373 = scalar_lea.vmem %s10, %s372
        %s377 = sld [smem:[#allocation2]]
        %s378 = sld [smem:[#allocation2 + $0x1]]
        %s379 = sld [smem:[#allocation2 + $0x2]]
        %s380 = sld [smem:[#allocation2 + $0x3]]
        %v381 = vld [vmem:[%s368] sm:$0xf]
        %v382 = vld [vmem:[%s368 + $0x4] sm:$0xf]
        %v383 = vld [vmem:[%s368 + $0x8] sm:$0xf]
        %v384 = vld [vmem:[%s368 + $0xc] sm:$0xf]
        %v385 = vld [vmem:[%s368 + $0x10] sm:$0xf]
        %v386 = vld [vmem:[%s368 + $0x14] sm:$0xf]
        %v387 = vld [vmem:[%s368 + $0x18] sm:$0xf]
        %v388 = vld [vmem:[%s368 + $0x1c] sm:$0xf]
        %v389 = vld [vmem:[%s1] sm:$0x3]
        %v390 = vld [vmem:[%s2] sm:$0x1]
        %v392 = vlaneseq
        %v393 = vshrl.u32 %v392, 7
        %v394 = vsub.s32 0, %v393
        %v395 = vrot.slane %v390, %v394
        %v405 = vunpack.c.l.b16 %v381
        %v406 = vunpack.c.l.b16 %v382
        %v407 = vunpack.c.l.b16 %v383
        %v408 = vunpack.c.l.b16 %v384
        %v409 = vunpack.c.l.b16 %v385
        %v410 = vunpack.c.l.b16 %v386
        %v411 = vunpack.c.l.b16 %v387
        %v412 = vunpack.c.l.b16 %v388
        %v413 = vpack.c.b16 %v406, %v405
        %v414 = vpack.c.b16 %v408, %v407
        %v415 = vpack.c.b16 %v410, %v409
        %v416 = vpack.c.b16 %v412, %v411
        %vm417 = vcmask 31744
        %v419 = vsel %vm417, %v413, 0
        %v422 = vsel %vm417, %v414, 0
        %v425 = vsel %vm417, %v415, 0
        %v428 = vsel %vm417, %v416, 0
        %vm430 = vcmask 1041408
        %v432 = vsel %vm430, %v389, 0
        %434 = vmatprep.subr.bf16.mxu0 0
        %435 = vmatpush1.bf16.msra.mxu0 %v432
        %436 = vmatprep.subr.bf16.mxu0 0
        %437 = vmatpush1.bf16.msra.mxu0 0
        %438 = vmatprep.subr.bf16.mxu0 0
        %439 = vmatpush1.bf16.msra.mxu0 0
        %440 = vmatprep.subr.bf16.mxu0 0
        %441 = vmatpush1.bf16.msra.mxu0 0
        %442 = vmatprep.subr.bf16.mxu0 0
        %443 = vmatpush1.bf16.msra.mxu0 0
        %444 = vmatprep.subr.bf16.mxu0 0
        %445 = vmatpush1.bf16.msra.mxu0 0
        %446 = vmatprep.subr.bf16.mxu0 0
        %447 = vmatpush1.bf16.msra.mxu0 0
        %448 = vmatprep.subr.bf16.mxu0 0
        %449 = vmatpush1.bf16.msra.mxu0 0
        %450 = vmatprep.subr.bf16.mxu0 0
        %451 = vmatpush1.bf16.msra.mxu0 0
        %452 = vmatprep.subr.bf16.mxu0 0
        %453 = vmatpush1.bf16.msra.mxu0 0
        %454 = vmatprep.subr.bf16.mxu0 0
        %455 = vmatpush1.bf16.msra.mxu0 0
        %456 = vmatprep.subr.bf16.mxu0 0
        %457 = vmatpush1.bf16.msra.mxu0 0
        %458 = vmatprep.subr.bf16.mxu0 0
        %459 = vmatpush1.bf16.msra.mxu0 0
        %460 = vmatprep.subr.bf16.mxu0 0
        %461 = vmatpush1.bf16.msra.mxu0 0
        %462 = vmatprep.subr.bf16.mxu0 0
        %463 = vmatpush1.bf16.msra.mxu0 0
        %464 = vmatprep.subr.bf16.mxu0 0
        %465 = vmatpush1.bf16.msra.mxu0 0
        %466 = vmatprep.mubr.bf16.mxu0 0
        %467 = vmatmul.mubr.bf16.gmra.mrb[0].mxu0 %v419
        %v468 = vpop.f32.mrb[0].mxu0
        %v469 = vadd.f32 %v395, %v468
        %v470 = vpop.f32.mrb[0].mxu0
        %v471 = vpop.f32.mrb[0].mxu0
        %v472 = vadd.f32 %v395, %v471
        %v473 = vpop.f32.mrb[0].mxu0
        %474 = vmatprep.mubr.bf16.mxu0 0
        %475 = vmatmul.mubr.bf16.gmra.mrb[0].mxu0 %v422
        %v476 = vpop.f32.mrb[0].mxu0
        %v477 = vadd.f32 %v395, %v476
        %v478 = vpop.f32.mrb[0].mxu0
        %v479 = vpop.f32.mrb[0].mxu0
        %v480 = vadd.f32 %v395, %v479
        %v481 = vpop.f32.mrb[0].mxu0
        %482 = vmatprep.mubr.bf16.mxu0 0
        %483 = vmatmul.mubr.bf16.gmra.mrb[0].mxu0 %v425
        %v484 = vpop.f32.mrb[0].mxu0
        %v485 = vadd.f32 %v395, %v484
        %v486 = vpop.f32.mrb[0].mxu0
        %v487 = vpop.f32.mrb[0].mxu0
        %v488 = vadd.f32 %v395, %v487
        %v489 = vpop.f32.mrb[0].mxu0
        %490 = vmatprep.mubr.bf16.mxu0 0
        %491 = vmatmul.mubr.bf16.gmra.mrb[0].mxu0 %v428
        %v492 = vpop.f32.mrb[0].mxu0
        %v493 = vadd.f32 %v395, %v492
        %v494 = vpop.f32.mrb[0].mxu0
        %v495 = vpop.f32.mrb[0].mxu0
        %v496 = vadd.f32 %v395, %v495
        %v497 = vpop.f32.mrb[0].mxu0
        %498 = vdwg.mxu0
        %vm499 = vcmp.ge.f32.partialorder %v469, 0.0
        %vm500 = vcmp.ge.f32.partialorder %v472, 0.0
        %vm501 = vcmp.ge.f32.partialorder %v477, 0.0
        %vm502 = vcmp.ge.f32.partialorder %v480, 0.0
        %vm503 = vcmp.ge.f32.partialorder %v485, 0.0
        %vm504 = vcmp.ge.f32.partialorder %v488, 0.0
        %vm505 = vcmp.ge.f32.partialorder %v493, 0.0
        %vm506 = vcmp.ge.f32.partialorder %v496, 0.0
        %v507 = vstv %s377
        %v508 = vmul.f32 %v507, %v469
        %v509 = vmul.f32 %v507, %v472
        %v510 = vmul.f32 %v507, %v477
        %v511 = vmul.f32 %v507, %v480
        %v512 = vmul.f32 %v507, %v485
        %v513 = vmul.f32 %v507, %v488
        %v514 = vmul.f32 %v507, %v493
        %v515 = vmul.f32 %v507, %v496
        %v516 = vsel %vm499, %v469, %v508
        %v517 = vsel %vm500, %v472, %v509
        %v518 = vsel %vm501, %v477, %v510
        %v519 = vsel %vm502, %v480, %v511
        %v520 = vsel %vm503, %v485, %v512
        %v521 = vsel %vm504, %v488, %v513
        %v522 = vsel %vm505, %v493, %v514
        %v523 = vsel %vm506, %v496, %v515
        %v524 = vlaneseq
        %v525 = vshrl.u32 %v524, 7
        %vm526 = vcmp.eq.s32.totalorder %v525, 0
        %vm527 = vcmp.eq.s32.totalorder %v525, 7
        %v528 = vpack.c.bf16 %v517, %v516
        %v529 = vpack.c.bf16 %v519, %v518
        %v530 = vpack.c.bf16 %v521, %v520
        %v531 = vpack.c.bf16 %v523, %v522
        %vm532 = vmpackc.low %vm526, %vm526
        %v533 = vsel %vm532, 65537, 0
        %v534 = vunpack.c.l.b16 %v533
        %v535 = vpack.c.b16 %v534, %v534
        %vm536 = vsmask.f32 3328
        %v538 = vshrl.u32 %v535, 16
        %v540 = vrot.slane %v538, 4
        %v541 = vshll.u32 %v535, 16
        %v543 = vrot.slane %v541, 5
        %v544 = vor.u32 %v540, %v543
        %v545 = vsel %vm536, %v544, %v544
        %vm546 = vcmp.ne.s16.totalorder %v545, 0
        %vm547 = vcmp.ne.s16.totalorder %v544, 0
        %v548 = vsel %vm546, 0, %v528
        %v549 = vsel %vm546, 0, %v529
        %v550 = vsel %vm546, 0, %v530
        %v551 = vsel %vm547, 0, %v531
        %vm552 = vmpackc.low %vm527, %vm527
        %v553 = vsel %vm552, 65537, 0
        %v554 = vunpack.c.l.b16 %v553
        %v555 = vpack.c.b16 %v554, %v554
        %vm556 = vsmask.f32 4352
        %v558 = vshrl.u32 %v555, 16
        %v560 = vrot.slane %v558, 3
        %v561 = vshll.u32 %v555, 16
        %v563 = vrot.slane %v561, 4
        %v564 = vor.u32 %v560, %v563
        %v565 = vsel %vm556, %v564, %v564
        %vm566 = vcmp.ne.s16.totalorder %v565, 0
        %vm567 = vcmp.ne.s16.totalorder %v564, 0
        %v568 = vsel %vm566, 0, %v528
        %v569 = vsel %vm566, 0, %v529
        %v570 = vsel %vm566, 0, %v530
        %v571 = vsel %vm567, 0, %v531
        %vm572 = vsmask.f32 7424
        %v573 = vrot.slane %v541, 1
        %v574 = vor.u32 %v538, %v573
        %v575 = vsel %vm572, %v574, %v573
        %vm576 = vcmp.ne.s16.totalorder %v575, 0
        %vm577 = vcmp.ne.s16.totalorder %v574, 0
        %v578 = vsel %vm576, 0, %v528
        %v579 = vsel %vm576, 0, %v529
        %v580 = vsel %vm576, 0, %v530
        %v581 = vsel %vm577, 0, %v531
        %vm582 = vsmask.f32 256
        %v583 = vrot.slane %v558, 7
        %v584 = vor.u32 %v583, %v561
        %v585 = vsel %vm582, %v583, %v584
        %vm586 = vcmp.ne.s16.totalorder %v584, 0
        %vm587 = vcmp.ne.s16.totalorder %v585, 0
        %v588 = vsel %vm586, 0, %v528
        %v589 = vsel %vm587, 0, %v529
        %v590 = vsel %vm587, 0, %v530
        %v591 = vsel %vm587, 0, %v531
        %v592 = vsel %vm547, 0, %v528
        %v593 = vsel %vm546, 0, %v531
        %v594 = vsel %vm567, 0, %v528
        %v595 = vsel %vm566, 0, %v531
        %v597 = vshrl.u32 0, 16
        %v599 = vshll.u32 0, 16
        %v601 = vrot.slane %v599, 1
        %v602 = vor.u32 %v597, %v601
        %v604 = vshll.u32 %v528, 16
        %v606 = vrot.slane %v604, 1
        %v607 = vsel %vm572, %v602, %v606
        %v608 = vshrl.u32 %v528, 16
        %v610 = vor.u32 %v608, %v606
        %v612 = vshll.u32 %v529, 16
        %v614 = vrot.slane %v612, 1
        %v615 = vsel %vm572, %v610, %v614
        %v616 = vshrl.u32 %v529, 16
        %v618 = vor.u32 %v616, %v614
        %v620 = vshll.u32 %v530, 16
        %v622 = vrot.slane %v620, 1
        %v623 = vsel %vm572, %v618, %v622
        %v624 = vshrl.u32 %v530, 16
        %v626 = vor.u32 %v624, %v622
        %v628 = vshll.u32 %v531, 16
        %v630 = vrot.slane %v628, 1
        %v631 = vsel %vm572, %v626, %v630
        %v632 = vshrl.u32 %v531, 16
        %v634 = vor.u32 %v632, %v630
        %635 = vrot.lane.b32.xlu0 %v607, 8
        %v636 = vpop.permute.xlu0 %635
        %637 = vrot.lane.b32.xlu0 %v615, 8
        %v638 = vpop.permute.xlu0 %637
        %639 = vrot.lane.b32.xlu0 %v623, 8
        %v640 = vpop.permute.xlu0 %639
        %641 = vrot.lane.b32.xlu0 %v631, 8
        %v642 = vpop.permute.xlu0 %641
        %643 = vrot.lane.b32.xlu0 %v634, 8
        %v644 = vpop.permute.xlu0 %643
        %vm650 = vcmask 1046528
        %v651 = vrot.slane 0, 1
        %v652 = vrot.slane %v568, 1
        %v653 = vsel %vm650, %v651, %v652
        %v654 = vrot.slane %v569, 1
        %v655 = vsel %vm650, %v652, %v654
        %v656 = vrot.slane %v570, 1
        %v657 = vsel %vm650, %v654, %v656
        %v658 = vrot.slane %v571, 1
        %v659 = vsel %vm650, %v656, %v658
        %660 = vrot.lane.b32.xlu0 %v653, 16
        %v661 = vpop.permute.xlu0 %660
        %662 = vrot.lane.b32.xlu0 %v655, 16
        %v663 = vpop.permute.xlu0 %662
        %664 = vrot.lane.b32.xlu0 %v657, 16
        %v665 = vpop.permute.xlu0 %664
        %666 = vrot.lane.b32.xlu0 %v659, 16
        %v667 = vpop.permute.xlu0 %666
        %668 = vrot.lane.b32.xlu0 %v658, 16
        %v669 = vpop.permute.xlu0 %668
        %vm674 = vcmask 1043456
        %v675 = vrot.slane 0, 4
        %v676 = vrot.slane %v578, 4
        %v677 = vsel %vm674, %v675, %v676
        %v678 = vrot.slane %v579, 4
        %v679 = vsel %vm674, %v676, %v678
        %v680 = vrot.slane %v580, 4
        %v681 = vsel %vm674, %v678, %v680
        %v682 = vrot.slane %v581, 4
        %v683 = vsel %vm674, %v680, %v682
        %684 = vrot.lane.b32.xlu0 %v677, 24
        %v685 = vpop.permute.xlu0 %684
        %686 = vrot.lane.b32.xlu0 %v679, 24
        %v687 = vpop.permute.xlu0 %686
        %688 = vrot.lane.b32.xlu0 %v681, 24
        %v689 = vpop.permute.xlu0 %688
        %690 = vrot.lane.b32.xlu0 %v683, 24
        %v691 = vpop.permute.xlu0 %690
        %692 = vrot.lane.b32.xlu0 %v682, 24
        %v693 = vpop.permute.xlu0 %692
        %v694 = vrot.slane %v608, 4
        %v695 = vrot.slane %v604, 5
        %v696 = vor.u32 %v694, %v695
        %v697 = vrot.slane %v616, 4
        %v698 = vrot.slane %v612, 5
        %v699 = vor.u32 %v697, %v698
        %v700 = vsel %vm536, %v696, %v699
        %v701 = vrot.slane %v624, 4
        %v702 = vrot.slane %v620, 5
        %v703 = vor.u32 %v701, %v702
        %v704 = vsel %vm536, %v699, %v703
        %v705 = vrot.slane %v632, 4
        %v706 = vrot.slane %v628, 5
        %v707 = vor.u32 %v705, %v706
        %v708 = vsel %vm536, %v703, %v707
        %709 = vrot.lane.b32.xlu0 %v696, 32
        %v710 = vpop.permute.xlu0 %709
        %711 = vrot.lane.b32.xlu0 %v700, 32
        %v712 = vpop.permute.xlu0 %711
        %713 = vrot.lane.b32.xlu0 %v704, 32
        %v714 = vpop.permute.xlu0 %713
        %715 = vrot.lane.b32.xlu0 %v708, 32
        %v716 = vpop.permute.xlu0 %715
        %717 = vrot.lane.b32.xlu0 %v707, 32
        %v718 = vpop.permute.xlu0 %717
        %vm723 = vcmask 1042432
        %v724 = vrot.slane %v588, 5
        %v725 = vrot.slane %v589, 5
        %v726 = vsel %vm723, %v724, %v725
        %v727 = vrot.slane %v590, 5
        %v728 = vsel %vm723, %v725, %v727
        %v729 = vrot.slane %v591, 5
        %v730 = vsel %vm723, %v727, %v729
        %v731 = vrot.slane 0, 5
        %v732 = vsel %vm723, %v729, %v731
        %733 = vrot.lane.b32.xlu0 %v724, 40
        %v734 = vpop.permute.xlu0 %733
        %735 = vrot.lane.b32.xlu0 %v726, 40
        %v736 = vpop.permute.xlu0 %735
        %737 = vrot.lane.b32.xlu0 %v728, 40
        %v738 = vpop.permute.xlu0 %737
        %739 = vrot.lane.b32.xlu0 %v730, 40
        %v740 = vpop.permute.xlu0 %739
        %741 = vrot.lane.b32.xlu0 %v732, 40
        %v742 = vpop.permute.xlu0 %741
        %747 = vrot.lane.b32.xlu0 %v592, 48
        %v748 = vpop.permute.xlu0 %747
        %749 = vrot.lane.b32.xlu0 %v549, 48
        %v750 = vpop.permute.xlu0 %749
        %751 = vrot.lane.b32.xlu0 %v550, 48
        %v752 = vpop.permute.xlu0 %751
        %753 = vrot.lane.b32.xlu0 %v593, 48
        %v754 = vpop.permute.xlu0 %753
        %755 = vrot.lane.b32.xlu0 0, 48
        %v756 = vpop.permute.xlu0 %755
        %v757 = vsel %vm572, %v634, %v601
        %758 = vrot.lane.b32.xlu0 %v615, 56
        %v759 = vpop.permute.xlu0 %758
        %760 = vrot.lane.b32.xlu0 %v623, 56
        %v761 = vpop.permute.xlu0 %760
        %762 = vrot.lane.b32.xlu0 %v631, 56
        %v763 = vpop.permute.xlu0 %762
        %764 = vrot.lane.b32.xlu0 %v757, 56
        %v765 = vpop.permute.xlu0 %764
        %766 = vrot.lane.b32.xlu0 %v602, 56
        %v767 = vpop.permute.xlu0 %766
        %v770 = vrot.slane %v594, 1
        %v771 = vsel %vm650, %v770, %v654
        %v772 = vrot.slane %v595, 1
        %v773 = vsel %vm650, %v656, %v772
        %v774 = vsel %vm650, %v772, %v651
        %775 = vrot.lane.b32.xlu0 %v771, 64
        %v776 = vpop.permute.xlu0 %775
        %777 = vrot.lane.b32.xlu0 %v657, 64
        %v778 = vpop.permute.xlu0 %777
        %779 = vrot.lane.b32.xlu0 %v773, 64
        %v780 = vpop.permute.xlu0 %779
        %781 = vrot.lane.b32.xlu0 %v774, 64
        %v782 = vpop.permute.xlu0 %781
        %783 = vrot.lane.b32.xlu0 %v651, 64
        %v784 = vpop.permute.xlu0 %783
        %vm785 = vcmask 64512
        %v787 = vsel %vm785, 0, %v636
        %v790 = vsel %vm785, %v548, %v638
        %v793 = vsel %vm785, %v549, %v640
        %v796 = vsel %vm785, %v550, %v642
        %v799 = vsel %vm785, %v551, %v644
        %vm800 = vcmask 130048
        %v802 = vsel %vm800, %v787, %v661
        %v804 = vsel %vm800, %v790, %v663
        %v806 = vsel %vm800, %v793, %v665
        %v808 = vsel %vm800, %v796, %v667
        %v810 = vsel %vm800, %v799, %v669
        %vm811 = vcmask 195584
        %v813 = vsel %vm811, %v802, %v685
        %v815 = vsel %vm811, %v804, %v687
        %v817 = vsel %vm811, %v806, %v689
        %v819 = vsel %vm811, %v808, %v691
        %v821 = vsel %vm811, %v810, %v693
        %vm822 = vcmask 261120
        %v824 = vsel %vm822, %v813, %v710
        %v826 = vsel %vm822, %v815, %v712
        %v828 = vsel %vm822, %v817, %v714
        %v830 = vsel %vm822, %v819, %v716
        %v832 = vsel %vm822, %v821, %v718
        %vm833 = vcmask 326656
        %v835 = vsel %vm833, %v824, %v734
        %v837 = vsel %vm833, %v826, %v736
        %v839 = vsel %vm833, %v828, %v738
        %v841 = vsel %vm833, %v830, %v740
        %v843 = vsel %vm833, %v832, %v742
        %vm844 = vcmask 392192
        %v846 = vsel %vm844, %v835, %v748
        %v848 = vsel %vm844, %v837, %v750
        %v850 = vsel %vm844, %v839, %v752
        %v852 = vsel %vm844, %v841, %v754
        %v854 = vsel %vm844, %v843, %v756
        %vm855 = vcmask 457728
        %v857 = vsel %vm855, %v846, %v759
        %v859 = vsel %vm855, %v848, %v761
        %v861 = vsel %vm855, %v850, %v763
        %v863 = vsel %vm855, %v852, %v765
        %v865 = vsel %vm855, %v854, %v767
        %vm866 = vcmask 523264
        %v868 = vsel %vm866, %v857, %v776
        %v870 = vsel %vm866, %v859, %v778
        %v872 = vsel %vm866, %v861, %v780
        %v874 = vsel %vm866, %v863, %v782
        %v876 = vsel %vm866, %v865, %v784
        %v877 = vld [vmem:[%s3] sm:$0xf]
        %v878 = vld [vmem:[%s3 + $0x4] sm:$0xf]
        %v879 = vld [vmem:[%s3 + $0x8] sm:$0xf]
        %v880 = vld [vmem:[%s3 + $0xc] sm:$0xf]
        %v881 = vld [vmem:[%s3 + $0x10] sm:$0xf]
        %v882 = vld [vmem:[%s3 + $0x14] sm:$0xf]
        %v883 = vld [vmem:[%s3 + $0x18] sm:$0xf]
        %v884 = vld [vmem:[%s3 + $0x1c] sm:$0xf]
        %v885 = vld [vmem:[%s3 + $0x20] sm:$0xf]
        %v886 = vld [vmem:[%s4] sm:$0x1]
        %v888 = vlaneseq
        %v889 = vshrl.u32 %v888, 7
        %v890 = vsub.s32 0, %v889
        %v891 = vrot.slane %v886, %v890
        %v893 = vshrl.u32 %v868, 16
        %v895 = vrot.slane %v893, 3
        %v896 = vshll.u32 %v868, 16
        %v898 = vrot.slane %v896, 4
        %v899 = vor.u32 %v895, %v898
        %v900 = vshrl.u32 %v870, 16
        %v902 = vrot.slane %v900, 3
        %v903 = vshll.u32 %v870, 16
        %v905 = vrot.slane %v903, 4
        %v906 = vor.u32 %v902, %v905
        %v907 = vsel %vm556, %v899, %v906
        %v908 = vshrl.u32 %v872, 16
        %v910 = vrot.slane %v908, 3
        %v911 = vshll.u32 %v872, 16
        %v913 = vrot.slane %v911, 4
        %v914 = vor.u32 %v910, %v913
        %v915 = vsel %vm556, %v906, %v914
        %v916 = vshrl.u32 %v874, 16
        %v918 = vrot.slane %v916, 3
        %v919 = vshll.u32 %v874, 16
        %v921 = vrot.slane %v919, 4
        %v922 = vor.u32 %v918, %v921
        %v923 = vsel %vm556, %v914, %v922
        %v924 = vshrl.u32 %v876, 16
        %v926 = vrot.slane %v924, 3
        %v927 = vshll.u32 %v876, 16
        %v929 = vrot.slane %v927, 4
        %v930 = vor.u32 %v926, %v929
        %v931 = vsel %vm556, %v922, %v930
        %v941 = vunpack.c.l.b16 %v877
        %v942 = vunpack.c.l.b16 %v878
        %v943 = vunpack.c.l.b16 %v879
        %v944 = vunpack.c.l.b16 %v880
        %v945 = vunpack.c.l.b16 %v881
        %v946 = vunpack.c.l.b16 %v882
        %v947 = vunpack.c.l.b16 %v883
        %v948 = vunpack.c.l.b16 %v884
        %v949 = vunpack.c.l.b16 %v885
        %v950 = vpack.c.b16 %v942, %v941
        %v951 = vpack.c.b16 %v944, %v943
        %v952 = vpack.c.b16 %v946, %v945
        %v953 = vpack.c.b16 %v948, %v947
        %v954 = vpack.c.b16 %v949, %v949
        %vm959 = vcmask 588800
        %v961 = vsel %vm959, %v907, 0
        %v964 = vsel %vm959, %v915, 0
        %v967 = vsel %vm959, %v923, 0
        %v970 = vsel %vm959, %v931, 0
        %vm972 = vcmask 1043456
        %v974 = vsel %vm972, %v954, 0
        %976 = vmatprep.subr.bf16.mxu0 0
        %977 = vmatpush1.bf16.msra.mxu0 %v950
        %978 = vmatprep.subr.bf16.mxu0 0
        %979 = vmatpush1.bf16.msra.mxu0 %v951
        %980 = vmatprep.subr.bf16.mxu0 0
        %981 = vmatpush1.bf16.msra.mxu0 %v952
        %982 = vmatprep.subr.bf16.mxu0 0
        %983 = vmatpush1.bf16.msra.mxu0 %v953
        %984 = vmatprep.subr.bf16.mxu0 0
        %985 = vmatpush1.bf16.msra.mxu0 %v974
        %986 = vmatprep.subr.bf16.mxu0 0
        %987 = vmatpush1.bf16.msra.mxu0 0
        %988 = vmatprep.subr.bf16.mxu0 0
        %989 = vmatpush1.bf16.msra.mxu0 0
        %990 = vmatprep.subr.bf16.mxu0 0
        %991 = vmatpush1.bf16.msra.mxu0 0
        %992 = vmatprep.subr.bf16.mxu0 0
        %993 = vmatpush1.bf16.msra.mxu0 0
        %994 = vmatprep.subr.bf16.mxu0 0
        %995 = vmatpush1.bf16.msra.mxu0 0
        %996 = vmatprep.subr.bf16.mxu0 0
        %997 = vmatpush1.bf16.msra.mxu0 0
        %998 = vmatprep.subr.bf16.mxu0 0
        %999 = vmatpush1.bf16.msra.mxu0 0
        %1000 = vmatprep.subr.bf16.mxu0 0
        %1001 = vmatpush1.bf16.msra.mxu0 0
        %1002 = vmatprep.subr.bf16.mxu0 0
        %1003 = vmatpush1.bf16.msra.mxu0 0
        %1004 = vmatprep.subr.bf16.mxu0 0
        %1005 = vmatpush1.bf16.msra.mxu0 0
        %1006 = vmatprep.subr.bf16.mxu0 0
        %1007 = vmatpush1.bf16.msra.mxu0 0
        %1008 = vmatprep.mubr.bf16.mxu0 0
        %1009 = vmatmul.mubr.bf16.gmra.mrb[0].mxu0 %v961
        %v1010 = vpop.f32.mrb[0].mxu0
        %v1011 = vadd.f32 %v891, %v1010
        %v1012 = vpop.f32.mrb[0].mxu0
        %v1013 = vpop.f32.mrb[0].mxu0
        %v1014 = vadd.f32 %v891, %v1013
        %v1015 = vpop.f32.mrb[0].mxu0
        %1016 = vmatprep.mubr.bf16.mxu0 0
        %1017 = vmatmul.mubr.bf16.gmra.mrb[0].mxu0 %v964
        %v1018 = vpop.f32.mrb[0].mxu0
        %v1019 = vadd.f32 %v891, %v1018
        %v1020 = vpop.f32.mrb[0].mxu0
        %v1021 = vpop.f32.mrb[0].mxu0
        %v1022 = vadd.f32 %v891, %v1021
        %v1023 = vpop.f32.mrb[0].mxu0
        %1024 = vmatprep.mubr.bf16.mxu0 0
        %1025 = vmatmul.mubr.bf16.gmra.mrb[0].mxu0 %v967
        %v1026 = vpop.f32.mrb[0].mxu0
        %v1027 = vadd.f32 %v891, %v1026
        %v1028 = vpop.f32.mrb[0].mxu0
        %v1029 = vpop.f32.mrb[0].mxu0
        %v1030 = vadd.f32 %v891, %v1029
        %v1031 = vpop.f32.mrb[0].mxu0
        %1032 = vmatprep.mubr.bf16.mxu0 0
        %1033 = vmatmul.mubr.bf16.gmra.mrb[0].mxu0 %v970
        %v1034 = vpop.f32.mrb[0].mxu0
        %v1035 = vadd.f32 %v891, %v1034
        %v1036 = vpop.f32.mrb[0].mxu0
        %v1037 = vpop.f32.mrb[0].mxu0
        %v1038 = vadd.f32 %v891, %v1037
        %v1039 = vpop.f32.mrb[0].mxu0
        %1040 = vdwg.mxu0
        %vm1041 = vcmp.ge.f32.partialorder %v1011, 0.0
        %vm1042 = vcmp.ge.f32.partialorder %v1014, 0.0
        %vm1043 = vcmp.ge.f32.partialorder %v1019, 0.0
        %vm1044 = vcmp.ge.f32.partialorder %v1022, 0.0
        %vm1045 = vcmp.ge.f32.partialorder %v1027, 0.0
        %vm1046 = vcmp.ge.f32.partialorder %v1030, 0.0
        %vm1047 = vcmp.ge.f32.partialorder %v1035, 0.0
        %vm1048 = vcmp.ge.f32.partialorder %v1038, 0.0
        %v1049 = vstv %s378
        %v1050 = vmul.f32 %v1049, %v1011
        %v1051 = vmul.f32 %v1049, %v1014
        %v1052 = vmul.f32 %v1049, %v1019
        %v1053 = vmul.f32 %v1049, %v1022
        %v1054 = vmul.f32 %v1049, %v1027
        %v1055 = vmul.f32 %v1049, %v1030
        %v1056 = vmul.f32 %v1049, %v1035
        %v1057 = vmul.f32 %v1049, %v1038
        %v1058 = vsel %vm1041, %v1011, %v1050
        %v1059 = vsel %vm1042, %v1014, %v1051
        %v1060 = vsel %vm1043, %v1019, %v1052
        %v1061 = vsel %vm1044, %v1022, %v1053
        %v1062 = vsel %vm1045, %v1027, %v1054
        %v1063 = vsel %vm1046, %v1030, %v1055
        %v1064 = vsel %vm1047, %v1035, %v1056
        %v1065 = vsel %vm1048, %v1038, %v1057
        %v1066 = vpack.c.bf16 %v1059, %v1058
        %v1067 = vpack.c.bf16 %v1061, %v1060
        %v1068 = vpack.c.bf16 %v1063, %v1062
        %v1069 = vpack.c.bf16 %v1065, %v1064
        %v1070 = vsel %vm546, 0, %v1066
        %v1071 = vsel %vm546, 0, %v1067
        %v1072 = vsel %vm546, 0, %v1068
        %v1073 = vsel %vm547, 0, %v1069
        %v1074 = vsel %vm566, 0, %v1066
        %v1075 = vsel %vm566, 0, %v1067
        %v1076 = vsel %vm566, 0, %v1068
        %v1077 = vsel %vm567, 0, %v1069
        %v1079 = vshll.u32 %v1066, 16
        %v1081 = vrot.slane %v1079, 1
        %v1082 = vsel %vm572, %v602, %v1081
        %v1083 = vshrl.u32 %v1066, 16
        %v1085 = vor.u32 %v1083, %v1081
        %v1087 = vshll.u32 %v1067, 16
        %v1089 = vrot.slane %v1087, 1
        %v1090 = vsel %vm572, %v1085, %v1089
        %v1091 = vshrl.u32 %v1067, 16
        %v1093 = vor.u32 %v1091, %v1089
        %v1095 = vshll.u32 %v1068, 16
        %v1097 = vrot.slane %v1095, 1
        %v1098 = vsel %vm572, %v1093, %v1097
        %v1099 = vshrl.u32 %v1068, 16
        %v1101 = vor.u32 %v1099, %v1097
        %v1103 = vshll.u32 %v1069, 16
        %v1105 = vrot.slane %v1103, 1
        %v1106 = vsel %vm572, %v1101, %v1105
        %v1107 = vshrl.u32 %v1069, 16
        %v1109 = vor.u32 %v1107, %v1105
        %v1114 = vrot.slane %v1074, 1
        %v1115 = vsel %vm650, %v651, %v1114
        %v1116 = vrot.slane %v1075, 1
        %v1117 = vsel %vm650, %v1114, %v1116
        %v1118 = vrot.slane %v1076, 1
        %v1119 = vsel %vm650, %v1116, %v1118
        %v1120 = vrot.slane %v1077, 1
        %v1121 = vsel %vm650, %v1118, %v1120
        %v1122 = vld [vmem:[%s5] sm:$0xf]
        %v1123 = vld [vmem:[%s5 + $0x4] sm:$0xf]
        %v1124 = vld [vmem:[%s5 + $0x8] sm:$0xf]
        %v1125 = vld [vmem:[%s5 + $0xc] sm:$0xf]
        %v1126 = vld [vmem:[%s5 + $0x10] sm:$0xf]
        %v1127 = vld [vmem:[%s5 + $0x14] sm:$0xf]
        %v1128 = vld [vmem:[%s5 + $0x18] sm:$0xf]
        %v1129 = vld [vmem:[%s5 + $0x1c] sm:$0xf]
        %v1130 = vld [vmem:[%s5 + $0x20] sm:$0xf]
        %v1131 = vld [vmem:[%s5 + $0x24] sm:$0xf]
        %v1132 = vld [vmem:[%s5 + $0x28] sm:$0xf]
        %v1133 = vld [vmem:[%s5 + $0x2c] sm:$0xf]
        %v1134 = vld [vmem:[%s5 + $0x30] sm:$0xf]
        %v1135 = vld [vmem:[%s5 + $0x34] sm:$0xf]
        %v1136 = vld [vmem:[%s5 + $0x38] sm:$0xf]
        %v1137 = vld [vmem:[%s5 + $0x3c] sm:$0xf]
        %v1138 = vld [vmem:[%s5 + $0x40] sm:$0xf]
        %v1139 = vld [vmem:[%s5 + $0x44] sm:$0xf]
        %v1140 = vld [vmem:[%s5 + $0x48] sm:$0xf]
        %v1141 = vld [vmem:[%s5 + $0x4c] sm:$0xf]
        %v1142 = vld [vmem:[%s5 + $0x50] sm:$0xf]
        %v1143 = vld [vmem:[%s5 + $0x54] sm:$0xf]
        %v1144 = vld [vmem:[%s5 + $0x58] sm:$0xf]
        %v1145 = vld [vmem:[%s5 + $0x5c] sm:$0xf]
        %v1146 = vld [vmem:[%s5 + $0x60] sm:$0xf]
        %v1147 = vld [vmem:[%s5 + $0x64] sm:$0xf]
        %v1148 = vld [vmem:[%s5 + $0x68] sm:$0xf]
        %v1149 = vld [vmem:[%s5 + $0x6c] sm:$0xf]
        %v1150 = vld [vmem:[%s5 + $0x70] sm:$0xf]
        %v1151 = vld [vmem:[%s5 + $0x74] sm:$0xf]
        %v1152 = vld [vmem:[%s5 + $0x78] sm:$0xf]
        %v1153 = vld [vmem:[%s5 + $0x7c] sm:$0xf]
        %v1154 = vld [vmem:[%s5 + $0x80] sm:$0xf]
        %v1155 = vld [vmem:[%s5 + $0x84] sm:$0xf]
        %v1156 = vld [vmem:[%s5 + $0x88] sm:$0xf]
        %v1157 = vld [vmem:[%s5 + $0x8c] sm:$0xf]
        %v1158 = vld [vmem:[%s5 + $0x90] sm:$0xf]
        %v1159 = vld [vmem:[%s5 + $0x94] sm:$0xf]
        %v1160 = vld [vmem:[%s5 + $0x98] sm:$0xf]
        %v1161 = vld [vmem:[%s5 + $0x9c] sm:$0xf]
        %v1162 = vld [vmem:[%s5 + $0xa0] sm:$0xf]
        %v1163 = vld [vmem:[%s5 + $0xa4] sm:$0xf]
        %v1164 = vld [vmem:[%s5 + $0xa8] sm:$0xf]
        %v1165 = vld [vmem:[%s5 + $0xac] sm:$0xf]
        %v1166 = vld [vmem:[%s5 + $0xb0] sm:$0xf]
        %v1167 = vld [vmem:[%s5 + $0xb4] sm:$0xf]
        %v1168 = vld [vmem:[%s5 + $0xb8] sm:$0xf]
        %v1169 = vld [vmem:[%s5 + $0xbc] sm:$0xf]
        %v1170 = vsel %vm576, 0, %v1066
        %v1171 = vsel %vm576, 0, %v1067
        %v1172 = vsel %vm576, 0, %v1068
        %v1173 = vsel %vm577, 0, %v1069
        %v1174 = vsel %vm586, 0, %v1066
        %v1175 = vsel %vm587, 0, %v1067
        %v1176 = vsel %vm587, 0, %v1068
        %v1177 = vsel %vm587, 0, %v1069
        %v1182 = vrot.slane %v1174, 1
        %v1183 = vrot.slane %v1175, 1
        %v1184 = vsel %vm650, %v1182, %v1183
        %v1185 = vrot.slane %v1176, 1
        %v1186 = vsel %vm650, %v1183, %v1185
        %v1187 = vrot.slane %v1177, 1
        %v1188 = vsel %vm650, %v1185, %v1187
        %v1189 = vsel %vm650, %v1187, %v651
        %s1190 = scalar_lea.vmem %s5, 192
        %v1191 = vld [vmem:[%s1190] sm:$0xf]
        %v1192 = vld [vmem:[%s1190 + $0x4] sm:$0xf]
        %v1193 = vld [vmem:[%s1190 + $0x8] sm:$0xf]
        %v1194 = vld [vmem:[%s1190 + $0xc] sm:$0xf]
        %v1195 = vld [vmem:[%s1190 + $0x10] sm:$0xf]
        %v1196 = vld [vmem:[%s1190 + $0x14] sm:$0xf]
        %v1197 = vld [vmem:[%s1190 + $0x18] sm:$0xf]
        %v1198 = vld [vmem:[%s1190 + $0x1c] sm:$0xf]
        %v1199 = vld [vmem:[%s1190 + $0x20] sm:$0xf]
        %v1200 = vld [vmem:[%s1190 + $0x24] sm:$0xf]
        %v1201 = vld [vmem:[%s1190 + $0x28] sm:$0xf]
        %v1202 = vld [vmem:[%s1190 + $0x2c] sm:$0xf]
        %v1203 = vld [vmem:[%s1190 + $0x30] sm:$0xf]
        %v1204 = vld [vmem:[%s1190 + $0x34] sm:$0xf]
        %v1205 = vld [vmem:[%s1190 + $0x38] sm:$0xf]
        %v1206 = vld [vmem:[%s1190 + $0x3c] sm:$0xf]
        %v1207 = vld [vmem:[%s1190 + $0x40] sm:$0xf]
        %v1208 = vld [vmem:[%s1190 + $0x44] sm:$0xf]
        %v1209 = vld [vmem:[%s1190 + $0x48] sm:$0xf]
        %v1210 = vld [vmem:[%s1190 + $0x4c] sm:$0xf]
        %v1211 = vld [vmem:[%s1190 + $0x50] sm:$0xf]
        %v1212 = vld [vmem:[%s1190 + $0x54] sm:$0xf]
        %v1213 = vld [vmem:[%s1190 + $0x58] sm:$0xf]
        %v1214 = vld [vmem:[%s1190 + $0x5c] sm:$0xf]
        %v1215 = vld [vmem:[%s1190 + $0x60] sm:$0xf]
        %v1216 = vld [vmem:[%s1190 + $0x64] sm:$0xf]
        %v1217 = vld [vmem:[%s1190 + $0x68] sm:$0xf]
        %v1218 = vld [vmem:[%s1190 + $0x6c] sm:$0xf]
        %v1219 = vld [vmem:[%s1190 + $0x70] sm:$0xf]
        %v1220 = vld [vmem:[%s1190 + $0x74] sm:$0xf]
        %v1221 = vld [vmem:[%s1190 + $0x78] sm:$0xf]
        %v1222 = vld [vmem:[%s1190 + $0x7c] sm:$0xf]
        %v1223 = vld [vmem:[%s1190 + $0x80] sm:$0xf]
        %v1224 = vld [vmem:[%s1190 + $0x84] sm:$0xf]
        %v1225 = vld [vmem:[%s1190 + $0x88] sm:$0xf]
        %v1226 = vld [vmem:[%s1190 + $0x8c] sm:$0xf]
        %v1227 = vld [vmem:[%s1190 + $0x90] sm:$0xf]
        %v1228 = vld [vmem:[%s1190 + $0x94] sm:$0xf]
        %v1229 = vld [vmem:[%s1190 + $0x98] sm:$0xf]
        %v1230 = vld [vmem:[%s1190 + $0x9c] sm:$0xf]
        %v1231 = vld [vmem:[%s1190 + $0xa0] sm:$0xf]
        %v1232 = vld [vmem:[%s1190 + $0xa4] sm:$0xf]
        %v1233 = vld [vmem:[%s1190 + $0xa8] sm:$0xf]
        %v1234 = vld [vmem:[%s1190 + $0xac] sm:$0xf]
        %v1235 = vld [vmem:[%s1190 + $0xb0] sm:$0xf]
        %v1236 = vld [vmem:[%s1190 + $0xb4] sm:$0xf]
        %v1237 = vld [vmem:[%s1190 + $0xb8] sm:$0xf]
        %v1238 = vld [vmem:[%s1190 + $0xbc] sm:$0xf]
        %v1239 = vrot.slane %v597, 7
        %v1241 = vshrl.u32 %v1170, 16
        %v1243 = vrot.slane %v1241, 7
        %v1244 = vshll.u32 %v1170, 16
        %v1246 = vor.u32 %v1243, %v1244
        %v1247 = vsel %vm582, %v1239, %v1246
        %v1249 = vshrl.u32 %v1081, 16
        %v1251 = vrot.slane %v1249, 7
        %v1253 = vshrl.u32 %v1090, 16
        %v1255 = vrot.slane %v1253, 7
        %v1256 = vshll.u32 %v1090, 16
        %v1258 = vor.u32 %v1255, %v1256
        %v1259 = vsel %vm582, %v1251, %v1258
        %v1261 = vshrl.u32 %v1182, 16
        %v1263 = vrot.slane %v1261, 7
        %v1265 = vshrl.u32 %v1184, 16
        %v1267 = vrot.slane %v1265, 7
        %v1268 = vshll.u32 %v1184, 16
        %v1270 = vor.u32 %v1267, %v1268
        %v1271 = vsel %vm582, %v1263, %v1270
        %v1273 = vshrl.u32 %v1171, 16
        %v1275 = vrot.slane %v1273, 7
        %v1276 = vshll.u32 %v1171, 16
        %v1278 = vor.u32 %v1275, %v1276
        %v1279 = vsel %vm582, %v1243, %v1278
        %v1281 = vshrl.u32 %v1098, 16
        %v1283 = vrot.slane %v1281, 7
        %v1284 = vshll.u32 %v1098, 16
        %v1286 = vor.u32 %v1283, %v1284
        %v1287 = vsel %vm582, %v1255, %v1286
        %v1289 = vshrl.u32 %v1186, 16
        %v1291 = vrot.slane %v1289, 7
        %v1292 = vshll.u32 %v1186, 16
        %v1294 = vor.u32 %v1291, %v1292
        %v1295 = vsel %vm582, %v1267, %v1294
        %v1297 = vshrl.u32 %v1172, 16
        %v1299 = vrot.slane %v1297, 7
        %v1300 = vshll.u32 %v1172, 16
        %v1302 = vor.u32 %v1299, %v1300
        %v1303 = vsel %vm582, %v1275, %v1302
        %v1305 = vshrl.u32 %v1106, 16
        %v1307 = vrot.slane %v1305, 7
        %v1308 = vshll.u32 %v1106, 16
        %v1310 = vor.u32 %v1307, %v1308
        %v1311 = vsel %vm582, %v1283, %v1310
        %v1313 = vshrl.u32 %v1188, 16
        %v1315 = vrot.slane %v1313, 7
        %v1316 = vshll.u32 %v1188, 16
        %v1318 = vor.u32 %v1315, %v1316
        %v1319 = vsel %vm582, %v1291, %v1318
        %v1321 = vshrl.u32 %v1173, 16
        %v1323 = vrot.slane %v1321, 7
        %v1324 = vshll.u32 %v1173, 16
        %v1326 = vor.u32 %v1323, %v1324
        %v1327 = vsel %vm582, %v1299, %v1326
        %v1329 = vshrl.u32 %v1109, 16
        %v1331 = vrot.slane %v1329, 7
        %v1332 = vshll.u32 %v1109, 16
        %v1334 = vor.u32 %v1331, %v1332
        %v1335 = vsel %vm582, %v1307, %v1334
        %v1337 = vshrl.u32 %v1189, 16
        %v1339 = vrot.slane %v1337, 7
        %v1340 = vshll.u32 %v1189, 16
        %v1342 = vor.u32 %v1339, %v1340
        %v1343 = vsel %vm582, %v1315, %v1342
        %v1404 = vunpack.c.l.b16 %v1191
        %v1405 = vunpack.c.l.b16 %v1192
        %v1406 = vunpack.c.l.b16 %v1193
        %v1407 = vunpack.c.l.b16 %v1194
        %v1408 = vunpack.c.l.b16 %v1195
        %v1409 = vunpack.c.l.b16 %v1196
        %v1410 = vunpack.c.l.b16 %v1197
        %v1411 = vunpack.c.l.b16 %v1198
        %v1412 = vunpack.c.l.b16 %v1199
        %v1413 = vunpack.c.l.b16 %v1200
        %v1414 = vunpack.c.l.b16 %v1201
        %v1415 = vunpack.c.l.b16 %v1202
        %v1416 = vunpack.c.l.b16 %v1203
        %v1417 = vunpack.c.l.b16 %v1204
        %v1418 = vunpack.c.l.b16 %v1205
        %v1419 = vunpack.c.l.b16 %v1206
        %v1420 = vunpack.c.l.b16 %v1207
        %v1421 = vunpack.c.l.b16 %v1208
        %v1422 = vunpack.c.l.b16 %v1209
        %v1423 = vunpack.c.l.b16 %v1210
        %v1424 = vunpack.c.l.b16 %v1211
        %v1425 = vunpack.c.l.b16 %v1212
        %v1426 = vunpack.c.l.b16 %v1213
        %v1427 = vunpack.c.l.b16 %v1214
        %v1428 = vunpack.c.l.b16 %v1215
        %v1429 = vunpack.c.l.b16 %v1216
        %v1430 = vunpack.c.l.b16 %v1217
        %v1431 = vunpack.c.l.b16 %v1218
        %v1432 = vunpack.c.l.b16 %v1219
        %v1433 = vunpack.c.l.b16 %v1220
        %v1434 = vunpack.c.l.b16 %v1221
        %v1435 = vunpack.c.l.b16 %v1222
        %v1436 = vunpack.c.l.b16 %v1223
        %v1437 = vunpack.c.l.b16 %v1224
        %v1438 = vunpack.c.l.b16 %v1225
        %v1439 = vunpack.c.l.b16 %v1226
        %v1440 = vunpack.c.l.b16 %v1227
        %v1441 = vunpack.c.l.b16 %v1228
        %v1442 = vunpack.c.l.b16 %v1229
        %v1443 = vunpack.c.l.b16 %v1230
        %v1444 = vunpack.c.l.b16 %v1231
        %v1445 = vunpack.c.l.b16 %v1232
        %v1446 = vunpack.c.l.b16 %v1233
        %v1447 = vunpack.c.l.b16 %v1234
        %v1448 = vunpack.c.l.b16 %v1235
        %v1449 = vunpack.c.l.b16 %v1236
        %v1450 = vunpack.c.l.b16 %v1237
        %v1451 = vunpack.c.l.b16 %v1238
        %v1452 = vpack.c.b16 %v1405, %v1404
        %v1453 = vpack.c.b16 %v1407, %v1406
        %v1454 = vpack.c.b16 %v1409, %v1408
        %v1455 = vpack.c.b16 %v1411, %v1410
        %v1456 = vpack.c.b16 %v1413, %v1412
        %v1457 = vpack.c.b16 %v1415, %v1414
        %v1458 = vpack.c.b16 %v1417, %v1416
        %v1459 = vpack.c.b16 %v1419, %v1418
        %v1460 = vpack.c.b16 %v1421, %v1420
        %v1461 = vpack.c.b16 %v1423, %v1422
        %v1462 = vpack.c.b16 %v1425, %v1424
        %v1463 = vpack.c.b16 %v1427, %v1426
        %v1464 = vpack.c.b16 %v1429, %v1428
        %v1465 = vpack.c.b16 %v1431, %v1430
        %v1466 = vpack.c.b16 %v1433, %v1432
        %v1467 = vpack.c.b16 %v1435, %v1434
        %v1468 = vpack.c.b16 %v1437, %v1436
        %v1469 = vpack.c.b16 %v1439, %v1438
        %v1470 = vpack.c.b16 %v1441, %v1440
        %v1471 = vpack.c.b16 %v1443, %v1442
        %v1472 = vpack.c.b16 %v1445, %v1444
        %v1473 = vpack.c.b16 %v1447, %v1446
        %v1474 = vpack.c.b16 %v1449, %v1448
        %v1475 = vpack.c.b16 %v1451, %v1450
        %1500 = vmatprep.subr.bf16.mxu0 0
        %1501 = vmatpush1.bf16.msra.mxu0 %v1452
        %1502 = vmatprep.subr.bf16.mxu0 0
        %1503 = vmatpush1.bf16.msra.mxu0 %v1453
        %1504 = vmatprep.subr.bf16.mxu0 0
        %1505 = vmatpush1.bf16.msra.mxu0 %v1454
        %1506 = vmatprep.subr.bf16.mxu0 0
        %1507 = vmatpush1.bf16.msra.mxu0 %v1455
        %1508 = vmatprep.subr.bf16.mxu0 0
        %1509 = vmatpush1.bf16.msra.mxu0 %v1456
        %1510 = vmatprep.subr.bf16.mxu0 0
        %1511 = vmatpush1.bf16.msra.mxu0 %v1457
        %1512 = vmatprep.subr.bf16.mxu0 0
        %1513 = vmatpush1.bf16.msra.mxu0 %v1458
        %1514 = vmatprep.subr.bf16.mxu0 0
        %1515 = vmatpush1.bf16.msra.mxu0 %v1459
        %1516 = vmatprep.subr.bf16.mxu0 0
        %1517 = vmatpush1.bf16.msra.mxu0 %v1460
        %1518 = vmatprep.subr.bf16.mxu0 0
        %1519 = vmatpush1.bf16.msra.mxu0 %v1461
        %1520 = vmatprep.subr.bf16.mxu0 0
        %1521 = vmatpush1.bf16.msra.mxu0 %v1462
        %1522 = vmatprep.subr.bf16.mxu0 0
        %1523 = vmatpush1.bf16.msra.mxu0 %v1463
        %1524 = vmatprep.subr.bf16.mxu0 0
        %1525 = vmatpush1.bf16.msra.mxu0 %v1464
        %1526 = vmatprep.subr.bf16.mxu0 0
        %1527 = vmatpush1.bf16.msra.mxu0 %v1465
        %1528 = vmatprep.subr.bf16.mxu0 0
        %1529 = vmatpush1.bf16.msra.mxu0 %v1466
        %1530 = vmatprep.subr.bf16.mxu0 0
        %1531 = vmatpush1.bf16.msra.mxu0 %v1467
        %1532 = vmatprep.mubr.bf16.mxu0 %v1259
        %1533 = vmatmul.mubr.bf16.gmra.mrb[0].mxu0 %v1247
        %v1534 = vpop.f32.mrb[0].mxu0
        %v1535 = vadd.f32 0.0, %v1534
        %v1536 = vpop.f32.mrb[0].mxu0
        %v1537 = vpop.f32.mrb[0].mxu0
        %v1538 = vadd.f32 0.0, %v1537
        %v1539 = vpop.f32.mrb[0].mxu0
        %1540 = vmatprep.mubr.bf16.mxu0 %v1287
        %1541 = vmatmul.mubr.bf16.gmra.mrb[0].mxu0 %v1279
        %v1542 = vpop.f32.mrb[0].mxu0
        %v1543 = vadd.f32 0.0, %v1542
        %v1544 = vpop.f32.mrb[0].mxu0
        %v1545 = vpop.f32.mrb[0].mxu0
        %v1546 = vadd.f32 0.0, %v1545
        %v1547 = vpop.f32.mrb[0].mxu0
        %1548 = vmatprep.mubr.bf16.mxu0 %v1311
        %1549 = vmatmul.mubr.bf16.gmra.mrb[0].mxu0 %v1303
        %v1550 = vpop.f32.mrb[0].mxu0
        %v1551 = vadd.f32 0.0, %v1550
        %v1552 = vpop.f32.mrb[0].mxu0
        %v1553 = vpop.f32.mrb[0].mxu0
        %v1554 = vadd.f32 0.0, %v1553
        %v1555 = vpop.f32.mrb[0].mxu0
        %1556 = vmatprep.mubr.bf16.mxu0 %v1335
        %1557 = vmatmul.mubr.bf16.gmra.mrb[0].mxu0 %v1327
        %v1558 = vpop.f32.mrb[0].mxu0
        %v1559 = vadd.f32 0.0, %v1558
        %v1560 = vpop.f32.mrb[0].mxu0
        %v1561 = vpop.f32.mrb[0].mxu0
        %v1562 = vadd.f32 0.0, %v1561
        %v1563 = vpop.f32.mrb[0].mxu0
        %1564 = vdwg.mxu0
        %1565 = vmatprep.subr.bf16.mxu0 0
        %1566 = vmatpush1.bf16.msra.mxu0 %v1468
        %1567 = vmatprep.subr.bf16.mxu0 0
        %1568 = vmatpush1.bf16.msra.mxu0 %v1469
        %1569 = vmatprep.subr.bf16.mxu0 0
        %1570 = vmatpush1.bf16.msra.mxu0 %v1470
        %1571 = vmatprep.subr.bf16.mxu0 0
        %1572 = vmatpush1.bf16.msra.mxu0 %v1471
        %1573 = vmatprep.subr.bf16.mxu0 0
        %1574 = vmatpush1.bf16.msra.mxu0 %v1472
        %1575 = vmatprep.subr.bf16.mxu0 0
        %1576 = vmatpush1.bf16.msra.mxu0 %v1473
        %1577 = vmatprep.subr.bf16.mxu0 0
        %1578 = vmatpush1.bf16.msra.mxu0 %v1474
        %1579 = vmatprep.subr.bf16.mxu0 0
        %1580 = vmatpush1.bf16.msra.mxu0 %v1475
        %1581 = vmatprep.subr.bf16.mxu0 0
        %1582 = vmatpush1.bf16.msra.mxu0 0
        %1583 = vmatprep.subr.bf16.mxu0 0
        %1584 = vmatpush1.bf16.msra.mxu0 0
        %1585 = vmatprep.subr.bf16.mxu0 0
        %1586 = vmatpush1.bf16.msra.mxu0 0
        %1587 = vmatprep.subr.bf16.mxu0 0
        %1588 = vmatpush1.bf16.msra.mxu0 0
        %1589 = vmatprep.subr.bf16.mxu0 0
        %1590 = vmatpush1.bf16.msra.mxu0 0
        %1591 = vmatprep.subr.bf16.mxu0 0
        %1592 = vmatpush1.bf16.msra.mxu0 0
        %1593 = vmatprep.subr.bf16.mxu0 0
        %1594 = vmatpush1.bf16.msra.mxu0 0
        %1595 = vmatprep.subr.bf16.mxu0 0
        %1596 = vmatpush1.bf16.msra.mxu0 0
        %1597 = vmatprep.mubr.bf16.mxu0 0
        %1598 = vmatmul.mubr.bf16.gmra.mrb[0].mxu0 %v1271
        %v1599 = vpop.f32.mrb[0].mxu0
        %v1600 = vadd.f32 %v1535, %v1599
        %v1601 = vpop.f32.mrb[0].mxu0
        %v1602 = vpop.f32.mrb[0].mxu0
        %v1603 = vadd.f32 %v1538, %v1602
        %v1604 = vpop.f32.mrb[0].mxu0
        %1605 = vmatprep.mubr.bf16.mxu0 0
        %1606 = vmatmul.mubr.bf16.gmra.mrb[0].mxu0 %v1295
        %v1607 = vpop.f32.mrb[0].mxu0
        %v1608 = vadd.f32 %v1543, %v1607
        %v1609 = vpop.f32.mrb[0].mxu0
        %v1610 = vpop.f32.mrb[0].mxu0
        %v1611 = vadd.f32 %v1546, %v1610
        %v1612 = vpop.f32.mrb[0].mxu0
        %1613 = vmatprep.mubr.bf16.mxu0 0
        %1614 = vmatmul.mubr.bf16.gmra.mrb[0].mxu0 %v1319
        %v1615 = vpop.f32.mrb[0].mxu0
        %v1616 = vadd.f32 %v1551, %v1615
        %v1617 = vpop.f32.mrb[0].mxu0
        %v1618 = vpop.f32.mrb[0].mxu0
        %v1619 = vadd.f32 %v1554, %v1618
        %v1620 = vpop.f32.mrb[0].mxu0
        %1621 = vmatprep.mubr.bf16.mxu0 0
        %1622 = vmatmul.mubr.bf16.gmra.mrb[0].mxu0 %v1343
        %v1623 = vpop.f32.mrb[0].mxu0
        %v1624 = vadd.f32 %v1559, %v1623
        %v1625 = vpop.f32.mrb[0].mxu0
        %v1626 = vpop.f32.mrb[0].mxu0
        %v1627 = vadd.f32 %v1562, %v1626
        %v1628 = vpop.f32.mrb[0].mxu0
        %1629 = vdwg.mxu0
        %v1630 = vrot.slane %v597, 3
        %v1631 = vrot.slane %v599, 4
        %v1632 = vor.u32 %v1630, %v1631
        %v1634 = vshrl.u32 %v1070, 16
        %v1636 = vrot.slane %v1634, 3
        %v1637 = vshll.u32 %v1070, 16
        %v1639 = vrot.slane %v1637, 4
        %v1640 = vor.u32 %v1636, %v1639
        %v1641 = vsel %vm556, %v1632, %v1640
        %v1643 = vshrl.u32 %v1082, 16
        %v1645 = vrot.slane %v1643, 3
        %v1646 = vshll.u32 %v1082, 16
        %v1648 = vrot.slane %v1646, 4
        %v1649 = vor.u32 %v1645, %v1648
        %v1650 = vrot.slane %v1253, 3
        %v1651 = vrot.slane %v1256, 4
        %v1652 = vor.u32 %v1650, %v1651
        %v1653 = vsel %vm556, %v1649, %v1652
        %v1655 = vshrl.u32 %v1115, 16
        %v1657 = vrot.slane %v1655, 3
        %v1658 = vshll.u32 %v1115, 16
        %v1660 = vrot.slane %v1658, 4
        %v1661 = vor.u32 %v1657, %v1660
        %v1663 = vshrl.u32 %v1117, 16
        %v1665 = vrot.slane %v1663, 3
        %v1666 = vshll.u32 %v1117, 16
        %v1668 = vrot.slane %v1666, 4
        %v1669 = vor.u32 %v1665, %v1668
        %v1670 = vsel %vm556, %v1661, %v1669
        %v1672 = vshrl.u32 %v1071, 16
        %v1674 = vrot.slane %v1672, 3
        %v1675 = vshll.u32 %v1071, 16
        %v1677 = vrot.slane %v1675, 4
        %v1678 = vor.u32 %v1674, %v1677
        %v1679 = vsel %vm556, %v1640, %v1678
        %v1680 = vrot.slane %v1281, 3
        %v1681 = vrot.slane %v1284, 4
        %v1682 = vor.u32 %v1680, %v1681
        %v1683 = vsel %vm556, %v1652, %v1682
        %v1685 = vshrl.u32 %v1119, 16
        %v1687 = vrot.slane %v1685, 3
        %v1688 = vshll.u32 %v1119, 16
        %v1690 = vrot.slane %v1688, 4
        %v1691 = vor.u32 %v1687, %v1690
        %v1692 = vsel %vm556, %v1669, %v1691
        %v1694 = vshrl.u32 %v1072, 16
        %v1696 = vrot.slane %v1694, 3
        %v1697 = vshll.u32 %v1072, 16
        %v1699 = vrot.slane %v1697, 4
        %v1700 = vor.u32 %v1696, %v1699
        %v1701 = vsel %vm556, %v1678, %v1700
        %v1702 = vrot.slane %v1305, 3
        %v1703 = vrot.slane %v1308, 4
        %v1704 = vor.u32 %v1702, %v1703
        %v1705 = vsel %vm556, %v1682, %v1704
        %v1707 = vshrl.u32 %v1121, 16
        %v1709 = vrot.slane %v1707, 3
        %v1710 = vshll.u32 %v1121, 16
        %v1712 = vrot.slane %v1710, 4
        %v1713 = vor.u32 %v1709, %v1712
        %v1714 = vsel %vm556, %v1691, %v1713
        %v1716 = vshrl.u32 %v1073, 16
        %v1718 = vrot.slane %v1716, 3
        %v1719 = vshll.u32 %v1073, 16
        %v1721 = vrot.slane %v1719, 4
        %v1722 = vor.u32 %v1718, %v1721
        %v1723 = vsel %vm556, %v1700, %v1722
        %v1724 = vrot.slane %v1329, 3
        %v1725 = vrot.slane %v1332, 4
        %v1726 = vor.u32 %v1724, %v1725
        %v1727 = vsel %vm556, %v1704, %v1726
        %v1729 = vshrl.u32 %v1120, 16
        %v1731 = vrot.slane %v1729, 3
        %v1732 = vshll.u32 %v1120, 16
        %v1734 = vrot.slane %v1732, 4
        %v1735 = vor.u32 %v1731, %v1734
        %v1736 = vsel %vm556, %v1713, %v1735
        %v1797 = vunpack.c.l.b16 %v1122
        %v1798 = vunpack.c.l.b16 %v1123
        %v1799 = vunpack.c.l.b16 %v1124
        %v1800 = vunpack.c.l.b16 %v1125
        %v1801 = vunpack.c.l.b16 %v1126
        %v1802 = vunpack.c.l.b16 %v1127
        %v1803 = vunpack.c.l.b16 %v1128
        %v1804 = vunpack.c.l.b16 %v1129
        %v1805 = vunpack.c.l.b16 %v1130
        %v1806 = vunpack.c.l.b16 %v1131
        %v1807 = vunpack.c.l.b16 %v1132
        %v1808 = vunpack.c.l.b16 %v1133
        %v1809 = vunpack.c.l.b16 %v1134
        %v1810 = vunpack.c.l.b16 %v1135
        %v1811 = vunpack.c.l.b16 %v1136
        %v1812 = vunpack.c.l.b16 %v1137
        %v1813 = vunpack.c.l.b16 %v1138
        %v1814 = vunpack.c.l.b16 %v1139
        %v1815 = vunpack.c.l.b16 %v1140
        %v1816 = vunpack.c.l.b16 %v1141
        %v1817 = vunpack.c.l.b16 %v1142
        %v1818 = vunpack.c.l.b16 %v1143
        %v1819 = vunpack.c.l.b16 %v1144
        %v1820 = vunpack.c.l.b16 %v1145
        %v1821 = vunpack.c.l.b16 %v1146
        %v1822 = vunpack.c.l.b16 %v1147
        %v1823 = vunpack.c.l.b16 %v1148
        %v1824 = vunpack.c.l.b16 %v1149
        %v1825 = vunpack.c.l.b16 %v1150
        %v1826 = vunpack.c.l.b16 %v1151
        %v1827 = vunpack.c.l.b16 %v1152
        %v1828 = vunpack.c.l.b16 %v1153
        %v1829 = vunpack.c.l.b16 %v1154
        %v1830 = vunpack.c.l.b16 %v1155
        %v1831 = vunpack.c.l.b16 %v1156
        %v1832 = vunpack.c.l.b16 %v1157
        %v1833 = vunpack.c.l.b16 %v1158
        %v1834 = vunpack.c.l.b16 %v1159
        %v1835 = vunpack.c.l.b16 %v1160
        %v1836 = vunpack.c.l.b16 %v1161
        %v1837 = vunpack.c.l.b16 %v1162
        %v1838 = vunpack.c.l.b16 %v1163
        %v1839 = vunpack.c.l.b16 %v1164
        %v1840 = vunpack.c.l.b16 %v1165
        %v1841 = vunpack.c.l.b16 %v1166
        %v1842 = vunpack.c.l.b16 %v1167
        %v1843 = vunpack.c.l.b16 %v1168
        %v1844 = vunpack.c.l.b16 %v1169
        %v1845 = vpack.c.b16 %v1798, %v1797
        %v1846 = vpack.c.b16 %v1800, %v1799
        %v1847 = vpack.c.b16 %v1802, %v1801
        %v1848 = vpack.c.b16 %v1804, %v1803
        %v1849 = vpack.c.b16 %v1806, %v1805
        %v1850 = vpack.c.b16 %v1808, %v1807
        %v1851 = vpack.c.b16 %v1810, %v1809
        %v1852 = vpack.c.b16 %v1812, %v1811
        %v1853 = vpack.c.b16 %v1814, %v1813
        %v1854 = vpack.c.b16 %v1816, %v1815
        %v1855 = vpack.c.b16 %v1818, %v1817
        %v1856 = vpack.c.b16 %v1820, %v1819
        %v1857 = vpack.c.b16 %v1822, %v1821
        %v1858 = vpack.c.b16 %v1824, %v1823
        %v1859 = vpack.c.b16 %v1826, %v1825
        %v1860 = vpack.c.b16 %v1828, %v1827
        %v1861 = vpack.c.b16 %v1830, %v1829
        %v1862 = vpack.c.b16 %v1832, %v1831
        %v1863 = vpack.c.b16 %v1834, %v1833
        %v1864 = vpack.c.b16 %v1836, %v1835
        %v1865 = vpack.c.b16 %v1838, %v1837
        %v1866 = vpack.c.b16 %v1840, %v1839
        %v1867 = vpack.c.b16 %v1842, %v1841
        %v1868 = vpack.c.b16 %v1844, %v1843
        %1893 = vmatprep.subr.bf16.mxu0 0
        %1894 = vmatpush1.bf16.msra.mxu0 %v1845
        %1895 = vmatprep.subr.bf16.mxu0 0
        %1896 = vmatpush1.bf16.msra.mxu0 %v1846
        %1897 = vmatprep.subr.bf16.mxu0 0
        %1898 = vmatpush1.bf16.msra.mxu0 %v1847
        %1899 = vmatprep.subr.bf16.mxu0 0
        %1900 = vmatpush1.bf16.msra.mxu0 %v1848
        %1901 = vmatprep.subr.bf16.mxu0 0
        %1902 = vmatpush1.bf16.msra.mxu0 %v1849
        %1903 = vmatprep.subr.bf16.mxu0 0
        %1904 = vmatpush1.bf16.msra.mxu0 %v1850
        %1905 = vmatprep.subr.bf16.mxu0 0
        %1906 = vmatpush1.bf16.msra.mxu0 %v1851
        %1907 = vmatprep.subr.bf16.mxu0 0
        %1908 = vmatpush1.bf16.msra.mxu0 %v1852
        %1909 = vmatprep.subr.bf16.mxu0 0
        %1910 = vmatpush1.bf16.msra.mxu0 %v1853
        %1911 = vmatprep.subr.bf16.mxu0 0
        %1912 = vmatpush1.bf16.msra.mxu0 %v1854
        %1913 = vmatprep.subr.bf16.mxu0 0
        %1914 = vmatpush1.bf16.msra.mxu0 %v1855
        %1915 = vmatprep.subr.bf16.mxu0 0
        %1916 = vmatpush1.bf16.msra.mxu0 %v1856
        %1917 = vmatprep.subr.bf16.mxu0 0
        %1918 = vmatpush1.bf16.msra.mxu0 %v1857
        %1919 = vmatprep.subr.bf16.mxu0 0
        %1920 = vmatpush1.bf16.msra.mxu0 %v1858
        %1921 = vmatprep.subr.bf16.mxu0 0
        %1922 = vmatpush1.bf16.msra.mxu0 %v1859
        %1923 = vmatprep.subr.bf16.mxu0 0
        %1924 = vmatpush1.bf16.msra.mxu0 %v1860
        %1925 = vmatprep.mubr.bf16.mxu0 %v1653
        %1926 = vmatmul.mubr.bf16.gmra.mrb[0].mxu0 %v1641
        %v1927 = vpop.f32.mrb[0].mxu0
        %v1928 = vadd.f32 %v1600, %v1927
        %v1929 = vpop.f32.mrb[0].mxu0
        %v1930 = vpop.f32.mrb[0].mxu0
        %v1931 = vadd.f32 %v1603, %v1930
        %v1932 = vpop.f32.mrb[0].mxu0
        %1933 = vmatprep.mubr.bf16.mxu0 %v1683
        %1934 = vmatmul.mubr.bf16.gmra.mrb[0].mxu0 %v1679
        %v1935 = vpop.f32.mrb[0].mxu0
        %v1936 = vadd.f32 %v1608, %v1935
        %v1937 = vpop.f32.mrb[0].mxu0
        %v1938 = vpop.f32.mrb[0].mxu0
        %v1939 = vadd.f32 %v1611, %v1938
        %v1940 = vpop.f32.mrb[0].mxu0
        %1941 = vmatprep.mubr.bf16.mxu0 %v1705
        %1942 = vmatmul.mubr.bf16.gmra.mrb[0].mxu0 %v1701
        %v1943 = vpop.f32.mrb[0].mxu0
        %v1944 = vadd.f32 %v1616, %v1943
        %v1945 = vpop.f32.mrb[0].mxu0
        %v1946 = vpop.f32.mrb[0].mxu0
        %v1947 = vadd.f32 %v1619, %v1946
        %v1948 = vpop.f32.mrb[0].mxu0
        %1949 = vmatprep.mubr.bf16.mxu0 %v1727
        %1950 = vmatmul.mubr.bf16.gmra.mrb[0].mxu0 %v1723
        %v1951 = vpop.f32.mrb[0].mxu0
        %v1952 = vadd.f32 %v1624, %v1951
        %v1953 = vpop.f32.mrb[0].mxu0
        %v1954 = vpop.f32.mrb[0].mxu0
        %v1955 = vadd.f32 %v1627, %v1954
        %v1956 = vpop.f32.mrb[0].mxu0
        %1957 = vdwg.mxu0
        %1958 = vmatprep.subr.bf16.mxu0 0
        %1959 = vmatpush1.bf16.msra.mxu0 %v1861
        %1960 = vmatprep.subr.bf16.mxu0 0
        %1961 = vmatpush1.bf16.msra.mxu0 %v1862
        %1962 = vmatprep.subr.bf16.mxu0 0
        %1963 = vmatpush1.bf16.msra.mxu0 %v1863
        %1964 = vmatprep.subr.bf16.mxu0 0
        %1965 = vmatpush1.bf16.msra.mxu0 %v1864
        %1966 = vmatprep.subr.bf16.mxu0 0
        %1967 = vmatpush1.bf16.msra.mxu0 %v1865
        %1968 = vmatprep.subr.bf16.mxu0 0
        %1969 = vmatpush1.bf16.msra.mxu0 %v1866
        %1970 = vmatprep.subr.bf16.mxu0 0
        %1971 = vmatpush1.bf16.msra.mxu0 %v1867
        %1972 = vmatprep.subr.bf16.mxu0 0
        %1973 = vmatpush1.bf16.msra.mxu0 %v1868
        %1974 = vmatprep.subr.bf16.mxu0 0
        %1975 = vmatpush1.bf16.msra.mxu0 0
        %1976 = vmatprep.subr.bf16.mxu0 0
        %1977 = vmatpush1.bf16.msra.mxu0 0
        %1978 = vmatprep.subr.bf16.mxu0 0
        %1979 = vmatpush1.bf16.msra.mxu0 0
        %1980 = vmatprep.subr.bf16.mxu0 0
        %1981 = vmatpush1.bf16.msra.mxu0 0
        %1982 = vmatprep.subr.bf16.mxu0 0
        %1983 = vmatpush1.bf16.msra.mxu0 0
        %1984 = vmatprep.subr.bf16.mxu0 0
        %1985 = vmatpush1.bf16.msra.mxu0 0
        %1986 = vmatprep.subr.bf16.mxu0 0
        %1987 = vmatpush1.bf16.msra.mxu0 0
        %1988 = vmatprep.subr.bf16.mxu0 0
        %1989 = vmatpush1.bf16.msra.mxu0 0
        %1990 = vmatprep.mubr.bf16.mxu0 0
        %1991 = vmatmul.mubr.bf16.gmra.mrb[0].mxu0 %v1670
        %v1992 = vpop.f32.mrb[0].mxu0
        %v1993 = vadd.f32 %v1928, %v1992
        %v1994 = vpop.f32.mrb[0].mxu0
        %v1995 = vpop.f32.mrb[0].mxu0
        %v1996 = vadd.f32 %v1931, %v1995
        %v1997 = vpop.f32.mrb[0].mxu0
        %1998 = vmatprep.mubr.bf16.mxu0 0
        %1999 = vmatmul.mubr.bf16.gmra.mrb[0].mxu0 %v1692
        %v2000 = vpop.f32.mrb[0].mxu0
        %v2001 = vadd.f32 %v1936, %v2000
        %v2002 = vpop.f32.mrb[0].mxu0
        %v2003 = vpop.f32.mrb[0].mxu0
        %v2004 = vadd.f32 %v1939, %v2003
        %v2005 = vpop.f32.mrb[0].mxu0
        %2006 = vmatprep.mubr.bf16.mxu0 0
        %2007 = vmatmul.mubr.bf16.gmra.mrb[0].mxu0 %v1714
        %v2008 = vpop.f32.mrb[0].mxu0
        %v2009 = vadd.f32 %v1944, %v2008
        %v2010 = vpop.f32.mrb[0].mxu0
        %v2011 = vpop.f32.mrb[0].mxu0
        %v2012 = vadd.f32 %v1947, %v2011
        %v2013 = vpop.f32.mrb[0].mxu0
        %2014 = vmatprep.mubr.bf16.mxu0 0
        %2015 = vmatmul.mubr.bf16.gmra.mrb[0].mxu0 %v1736
        %v2016 = vpop.f32.mrb[0].mxu0
        %v2017 = vadd.f32 %v1952, %v2016
        %v2018 = vpop.f32.mrb[0].mxu0
        %v2019 = vpop.f32.mrb[0].mxu0
        %v2020 = vadd.f32 %v1955, %v2019
        %v2021 = vpop.f32.mrb[0].mxu0
        %2022 = vdwg.mxu0
        %v2023 = vsel %vm547, 0, %v1066
        %v2024 = vsel %vm546, 0, %v1069
        %v2025 = vsel %vm567, 0, %v1066
        %v2026 = vsel %vm566, 0, %v1069
        %v2027 = vsel %vm572, %v1109, %v601
        %v2030 = vrot.slane %v2025, 1
        %v2031 = vsel %vm650, %v2030, %v1116
        %v2032 = vrot.slane %v2026, 1
        %v2033 = vsel %vm650, %v1118, %v2032
        %v2034 = vsel %vm650, %v2032, %v651
        %s2035 = scalar_lea.vmem %s5, 384
        %v2036 = vld [vmem:[%s2035] sm:$0xf]
        %v2037 = vld [vmem:[%s2035 + $0x4] sm:$0xf]
        %v2038 = vld [vmem:[%s2035 + $0x8] sm:$0xf]
        %v2039 = vld [vmem:[%s2035 + $0xc] sm:$0xf]
        %v2040 = vld [vmem:[%s2035 + $0x10] sm:$0xf]
        %v2041 = vld [vmem:[%s2035 + $0x14] sm:$0xf]
        %v2042 = vld [vmem:[%s2035 + $0x18] sm:$0xf]
        %v2043 = vld [vmem:[%s2035 + $0x1c] sm:$0xf]
        %v2044 = vld [vmem:[%s2035 + $0x20] sm:$0xf]
        %v2045 = vld [vmem:[%s2035 + $0x24] sm:$0xf]
        %v2046 = vld [vmem:[%s2035 + $0x28] sm:$0xf]
        %v2047 = vld [vmem:[%s2035 + $0x2c] sm:$0xf]
        %v2048 = vld [vmem:[%s2035 + $0x30] sm:$0xf]
        %v2049 = vld [vmem:[%s2035 + $0x34] sm:$0xf]
        %v2050 = vld [vmem:[%s2035 + $0x38] sm:$0xf]
        %v2051 = vld [vmem:[%s2035 + $0x3c] sm:$0xf]
        %v2052 = vld [vmem:[%s2035 + $0x40] sm:$0xf]
        %v2053 = vld [vmem:[%s2035 + $0x44] sm:$0xf]
        %v2054 = vld [vmem:[%s2035 + $0x48] sm:$0xf]
        %v2055 = vld [vmem:[%s2035 + $0x4c] sm:$0xf]
        %v2056 = vld [vmem:[%s2035 + $0x50] sm:$0xf]
        %v2057 = vld [vmem:[%s2035 + $0x54] sm:$0xf]
        %v2058 = vld [vmem:[%s2035 + $0x58] sm:$0xf]
        %v2059 = vld [vmem:[%s2035 + $0x5c] sm:$0xf]
        %v2060 = vld [vmem:[%s2035 + $0x60] sm:$0xf]
        %v2061 = vld [vmem:[%s2035 + $0x64] sm:$0xf]
        %v2062 = vld [vmem:[%s2035 + $0x68] sm:$0xf]
        %v2063 = vld [vmem:[%s2035 + $0x6c] sm:$0xf]
        %v2064 = vld [vmem:[%s2035 + $0x70] sm:$0xf]
        %v2065 = vld [vmem:[%s2035 + $0x74] sm:$0xf]
        %v2066 = vld [vmem:[%s2035 + $0x78] sm:$0xf]
        %v2067 = vld [vmem:[%s2035 + $0x7c] sm:$0xf]
        %v2068 = vld [vmem:[%s2035 + $0x80] sm:$0xf]
        %v2069 = vld [vmem:[%s2035 + $0x84] sm:$0xf]
        %v2070 = vld [vmem:[%s2035 + $0x88] sm:$0xf]
        %v2071 = vld [vmem:[%s2035 + $0x8c] sm:$0xf]
        %v2072 = vld [vmem:[%s2035 + $0x90] sm:$0xf]
        %v2073 = vld [vmem:[%s2035 + $0x94] sm:$0xf]
        %v2074 = vld [vmem:[%s2035 + $0x98] sm:$0xf]
        %v2075 = vld [vmem:[%s2035 + $0x9c] sm:$0xf]
        %v2076 = vld [vmem:[%s2035 + $0xa0] sm:$0xf]
        %v2077 = vld [vmem:[%s2035 + $0xa4] sm:$0xf]
        %v2078 = vld [vmem:[%s2035 + $0xa8] sm:$0xf]
        %v2079 = vld [vmem:[%s2035 + $0xac] sm:$0xf]
        %v2080 = vld [vmem:[%s2035 + $0xb0] sm:$0xf]
        %v2081 = vld [vmem:[%s2035 + $0xb4] sm:$0xf]
        %v2082 = vld [vmem:[%s2035 + $0xb8] sm:$0xf]
        %v2083 = vld [vmem:[%s2035 + $0xbc] sm:$0xf]
        %v2085 = vshrl.u32 %v2023, 16
        %v2087 = vrot.slane %v2085, 3
        %v2088 = vshll.u32 %v2023, 16
        %v2090 = vrot.slane %v2088, 4
        %v2091 = vor.u32 %v2087, %v2090
        %v2092 = vsel %vm556, %v2091, %v1678
        %v2094 = vshrl.u32 %v2031, 16
        %v2096 = vrot.slane %v2094, 3
        %v2097 = vshll.u32 %v2031, 16
        %v2099 = vrot.slane %v2097, 4
        %v2100 = vor.u32 %v2096, %v2099
        %v2101 = vsel %vm556, %v2100, %v1691
        %v2103 = vshrl.u32 %v2033, 16
        %v2105 = vrot.slane %v2103, 3
        %v2106 = vshll.u32 %v2033, 16
        %v2108 = vrot.slane %v2106, 4
        %v2109 = vor.u32 %v2105, %v2108
        %v2110 = vsel %vm556, %v1691, %v2109
        %v2112 = vshrl.u32 %v2024, 16
        %v2114 = vrot.slane %v2112, 3
        %v2115 = vshll.u32 %v2024, 16
        %v2117 = vrot.slane %v2115, 4
        %v2118 = vor.u32 %v2114, %v2117
        %v2119 = vsel %vm556, %v1700, %v2118
        %v2121 = vshrl.u32 %v2027, 16
        %v2123 = vrot.slane %v2121, 3
        %v2124 = vshll.u32 %v2027, 16
        %v2126 = vrot.slane %v2124, 4
        %v2127 = vor.u32 %v2123, %v2126
        %v2128 = vsel %vm556, %v1704, %v2127
        %v2130 = vshrl.u32 %v2034, 16
        %v2132 = vrot.slane %v2130, 3
        %v2133 = vshll.u32 %v2034, 16
        %v2135 = vrot.slane %v2133, 4
        %v2136 = vor.u32 %v2132, %v2135
        %v2137 = vsel %vm556, %v2109, %v2136
        %v2138 = vsel %vm556, %v2118, %v1632
        %v2140 = vshrl.u32 %v602, 16
        %v2142 = vrot.slane %v2140, 3
        %v2143 = vshll.u32 %v602, 16
        %v2145 = vrot.slane %v2143, 4
        %v2146 = vor.u32 %v2142, %v2145
        %v2147 = vsel %vm556, %v2127, %v2146
        %v2149 = vshrl.u32 %v651, 16
        %v2151 = vrot.slane %v2149, 3
        %v2152 = vshll.u32 %v651, 16
        %v2154 = vrot.slane %v2152, 4
        %v2155 = vor.u32 %v2151, %v2154
        %v2156 = vsel %vm556, %v2136, %v2155
        %v2214 = vunpack.c.l.b16 %v2036
        %v2215 = vunpack.c.l.b16 %v2037
        %v2216 = vunpack.c.l.b16 %v2038
        %v2217 = vunpack.c.l.b16 %v2039
        %v2218 = vunpack.c.l.b16 %v2040
        %v2219 = vunpack.c.l.b16 %v2041
        %v2220 = vunpack.c.l.b16 %v2042
        %v2221 = vunpack.c.l.b16 %v2043
        %v2222 = vunpack.c.l.b16 %v2044
        %v2223 = vunpack.c.l.b16 %v2045
        %v2224 = vunpack.c.l.b16 %v2046
        %v2225 = vunpack.c.l.b16 %v2047
        %v2226 = vunpack.c.l.b16 %v2048
        %v2227 = vunpack.c.l.b16 %v2049
        %v2228 = vunpack.c.l.b16 %v2050
        %v2229 = vunpack.c.l.b16 %v2051
        %v2230 = vunpack.c.l.b16 %v2052
        %v2231 = vunpack.c.l.b16 %v2053
        %v2232 = vunpack.c.l.b16 %v2054
        %v2233 = vunpack.c.l.b16 %v2055
        %v2234 = vunpack.c.l.b16 %v2056
        %v2235 = vunpack.c.l.b16 %v2057
        %v2236 = vunpack.c.l.b16 %v2058
        %v2237 = vunpack.c.l.b16 %v2059
        %v2238 = vunpack.c.l.b16 %v2060
        %v2239 = vunpack.c.l.b16 %v2061
        %v2240 = vunpack.c.l.b16 %v2062
        %v2241 = vunpack.c.l.b16 %v2063
        %v2242 = vunpack.c.l.b16 %v2064
        %v2243 = vunpack.c.l.b16 %v2065
        %v2244 = vunpack.c.l.b16 %v2066
        %v2245 = vunpack.c.l.b16 %v2067
        %v2246 = vunpack.c.l.b16 %v2068
        %v2247 = vunpack.c.l.b16 %v2069
        %v2248 = vunpack.c.l.b16 %v2070
        %v2249 = vunpack.c.l.b16 %v2071
        %v2250 = vunpack.c.l.b16 %v2072
        %v2251 = vunpack.c.l.b16 %v2073
        %v2252 = vunpack.c.l.b16 %v2074
        %v2253 = vunpack.c.l.b16 %v2075
        %v2254 = vunpack.c.l.b16 %v2076
        %v2255 = vunpack.c.l.b16 %v2077
        %v2256 = vunpack.c.l.b16 %v2078
        %v2257 = vunpack.c.l.b16 %v2079
        %v2258 = vunpack.c.l.b16 %v2080
        %v2259 = vunpack.c.l.b16 %v2081
        %v2260 = vunpack.c.l.b16 %v2082
        %v2261 = vunpack.c.l.b16 %v2083
        %v2262 = vpack.c.b16 %v2215, %v2214
        %v2263 = vpack.c.b16 %v2217, %v2216
        %v2264 = vpack.c.b16 %v2219, %v2218
        %v2265 = vpack.c.b16 %v2221, %v2220
        %v2266 = vpack.c.b16 %v2223, %v2222
        %v2267 = vpack.c.b16 %v2225, %v2224
        %v2268 = vpack.c.b16 %v2227, %v2226
        %v2269 = vpack.c.b16 %v2229, %v2228
        %v2270 = vpack.c.b16 %v2231, %v2230
        %v2271 = vpack.c.b16 %v2233, %v2232
        %v2272 = vpack.c.b16 %v2235, %v2234
        %v2273 = vpack.c.b16 %v2237, %v2236
        %v2274 = vpack.c.b16 %v2239, %v2238
        %v2275 = vpack.c.b16 %v2241, %v2240
        %v2276 = vpack.c.b16 %v2243, %v2242
        %v2277 = vpack.c.b16 %v2245, %v2244
        %v2278 = vpack.c.b16 %v2247, %v2246
        %v2279 = vpack.c.b16 %v2249, %v2248
        %v2280 = vpack.c.b16 %v2251, %v2250
        %v2281 = vpack.c.b16 %v2253, %v2252
        %v2282 = vpack.c.b16 %v2255, %v2254
        %v2283 = vpack.c.b16 %v2257, %v2256
        %v2284 = vpack.c.b16 %v2259, %v2258
        %v2285 = vpack.c.b16 %v2261, %v2260
        %2310 = vmatprep.subr.bf16.mxu0 0
        %2311 = vmatpush1.bf16.msra.mxu0 %v2262
        %2312 = vmatprep.subr.bf16.mxu0 0
        %2313 = vmatpush1.bf16.msra.mxu0 %v2263
        %2314 = vmatprep.subr.bf16.mxu0 0
        %2315 = vmatpush1.bf16.msra.mxu0 %v2264
        %2316 = vmatprep.subr.bf16.mxu0 0
        %2317 = vmatpush1.bf16.msra.mxu0 %v2265
        %2318 = vmatprep.subr.bf16.mxu0 0
        %2319 = vmatpush1.bf16.msra.mxu0 %v2266
        %2320 = vmatprep.subr.bf16.mxu0 0
        %2321 = vmatpush1.bf16.msra.mxu0 %v2267
        %2322 = vmatprep.subr.bf16.mxu0 0
        %2323 = vmatpush1.bf16.msra.mxu0 %v2268
        %2324 = vmatprep.subr.bf16.mxu0 0
        %2325 = vmatpush1.bf16.msra.mxu0 %v2269
        %2326 = vmatprep.subr.bf16.mxu0 0
        %2327 = vmatpush1.bf16.msra.mxu0 %v2270
        %2328 = vmatprep.subr.bf16.mxu0 0
        %2329 = vmatpush1.bf16.msra.mxu0 %v2271
        %2330 = vmatprep.subr.bf16.mxu0 0
        %2331 = vmatpush1.bf16.msra.mxu0 %v2272
        %2332 = vmatprep.subr.bf16.mxu0 0
        %2333 = vmatpush1.bf16.msra.mxu0 %v2273
        %2334 = vmatprep.subr.bf16.mxu0 0
        %2335 = vmatpush1.bf16.msra.mxu0 %v2274
        %2336 = vmatprep.subr.bf16.mxu0 0
        %2337 = vmatpush1.bf16.msra.mxu0 %v2275
        %2338 = vmatprep.subr.bf16.mxu0 0
        %2339 = vmatpush1.bf16.msra.mxu0 %v2276
        %2340 = vmatprep.subr.bf16.mxu0 0
        %2341 = vmatpush1.bf16.msra.mxu0 %v2277
        %2342 = vmatprep.mubr.bf16.mxu0 %v1683
        %2343 = vmatmul.mubr.bf16.gmra.mrb[0].mxu0 %v2092
        %v2344 = vpop.f32.mrb[0].mxu0
        %v2345 = vadd.f32 0.0, %v2344
        %v2346 = vpop.f32.mrb[0].mxu0
        %v2347 = vpop.f32.mrb[0].mxu0
        %v2348 = vadd.f32 0.0, %v2347
        %v2349 = vpop.f32.mrb[0].mxu0
        %2350 = vmatprep.mubr.bf16.mxu0 %v1705
        %2351 = vmatmul.mubr.bf16.gmra.mrb[0].mxu0 %v1701
        %v2352 = vpop.f32.mrb[0].mxu0
        %v2353 = vadd.f32 0.0, %v2352
        %v2354 = vpop.f32.mrb[0].mxu0
        %v2355 = vpop.f32.mrb[0].mxu0
        %v2356 = vadd.f32 0.0, %v2355
        %v2357 = vpop.f32.mrb[0].mxu0
        %2358 = vmatprep.mubr.bf16.mxu0 %v2128
        %2359 = vmatmul.mubr.bf16.gmra.mrb[0].mxu0 %v2119
        %v2360 = vpop.f32.mrb[0].mxu0
        %v2361 = vadd.f32 0.0, %v2360
        %v2362 = vpop.f32.mrb[0].mxu0
        %v2363 = vpop.f32.mrb[0].mxu0
        %v2364 = vadd.f32 0.0, %v2363
        %v2365 = vpop.f32.mrb[0].mxu0
        %2366 = vmatprep.mubr.bf16.mxu0 %v2147
        %2367 = vmatmul.mubr.bf16.gmra.mrb[0].mxu0 %v2138
        %v2368 = vpop.f32.mrb[0].mxu0
        %v2369 = vadd.f32 0.0, %v2368
        %v2370 = vpop.f32.mrb[0].mxu0
        %v2371 = vpop.f32.mrb[0].mxu0
        %v2372 = vadd.f32 0.0, %v2371
        %v2373 = vpop.f32.mrb[0].mxu0
        %2374 = vdwg.mxu0
        %2375 = vmatprep.subr.bf16.mxu0 0
        %2376 = vmatpush1.bf16.msra.mxu0 %v2278
        %2377 = vmatprep.subr.bf16.mxu0 0
        %2378 = vmatpush1.bf16.msra.mxu0 %v2279
        %2379 = vmatprep.subr.bf16.mxu0 0
        %2380 = vmatpush1.bf16.msra.mxu0 %v2280
        %2381 = vmatprep.subr.bf16.mxu0 0
        %2382 = vmatpush1.bf16.msra.mxu0 %v2281
        %2383 = vmatprep.subr.bf16.mxu0 0
        %2384 = vmatpush1.bf16.msra.mxu0 %v2282
        %2385 = vmatprep.subr.bf16.mxu0 0
        %2386 = vmatpush1.bf16.msra.mxu0 %v2283
        %2387 = vmatprep.subr.bf16.mxu0 0
        %2388 = vmatpush1.bf16.msra.mxu0 %v2284
        %2389 = vmatprep.subr.bf16.mxu0 0
        %2390 = vmatpush1.bf16.msra.mxu0 %v2285
        %2391 = vmatprep.subr.bf16.mxu0 0
        %2392 = vmatpush1.bf16.msra.mxu0 0
        %2393 = vmatprep.subr.bf16.mxu0 0
        %2394 = vmatpush1.bf16.msra.mxu0 0
        %2395 = vmatprep.subr.bf16.mxu0 0
        %2396 = vmatpush1.bf16.msra.mxu0 0
        %2397 = vmatprep.subr.bf16.mxu0 0
        %2398 = vmatpush1.bf16.msra.mxu0 0
        %2399 = vmatprep.subr.bf16.mxu0 0
        %2400 = vmatpush1.bf16.msra.mxu0 0
        %2401 = vmatprep.subr.bf16.mxu0 0
        %2402 = vmatpush1.bf16.msra.mxu0 0
        %2403 = vmatprep.subr.bf16.mxu0 0
        %2404 = vmatpush1.bf16.msra.mxu0 0
        %2405 = vmatprep.subr.bf16.mxu0 0
        %2406 = vmatpush1.bf16.msra.mxu0 0
        %2407 = vmatprep.mubr.bf16.mxu0 0
        %2408 = vmatmul.mubr.bf16.gmra.mrb[0].mxu0 %v2101
        %v2409 = vpop.f32.mrb[0].mxu0
        %v2410 = vadd.f32 %v2345, %v2409
        %v2411 = vpop.f32.mrb[0].mxu0
        %v2412 = vpop.f32.mrb[0].mxu0
        %v2413 = vadd.f32 %v2348, %v2412
        %v2414 = vpop.f32.mrb[0].mxu0
        %2415 = vmatprep.mubr.bf16.mxu0 0
        %2416 = vmatmul.mubr.bf16.gmra.mrb[0].mxu0 %v2110
        %v2417 = vpop.f32.mrb[0].mxu0
        %v2418 = vadd.f32 %v2353, %v2417
        %v2419 = vpop.f32.mrb[0].mxu0
        %v2420 = vpop.f32.mrb[0].mxu0
        %v2421 = vadd.f32 %v2356, %v2420
        %v2422 = vpop.f32.mrb[0].mxu0
        %2423 = vmatprep.mubr.bf16.mxu0 0
        %2424 = vmatmul.mubr.bf16.gmra.mrb[0].mxu0 %v2137
        %v2425 = vpop.f32.mrb[0].mxu0
        %v2426 = vadd.f32 %v2361, %v2425
        %v2427 = vpop.f32.mrb[0].mxu0
        %v2428 = vpop.f32.mrb[0].mxu0
        %v2429 = vadd.f32 %v2364, %v2428
        %v2430 = vpop.f32.mrb[0].mxu0
        %2431 = vmatprep.mubr.bf16.mxu0 0
        %2432 = vmatmul.mubr.bf16.gmra.mrb[0].mxu0 %v2156
        %v2433 = vpop.f32.mrb[0].mxu0
        %v2434 = vadd.f32 %v2369, %v2433
        %v2435 = vpop.f32.mrb[0].mxu0
        %v2436 = vpop.f32.mrb[0].mxu0
        %v2437 = vadd.f32 %v2372, %v2436
        %v2438 = vpop.f32.mrb[0].mxu0
        %2439 = vdwg.mxu0
        %v2440 = vadd.f32 %v1993, %v2410
        %v2441 = vadd.f32 %v1996, %v2413
        %v2442 = vadd.f32 %v2001, %v2418
        %v2443 = vadd.f32 %v2004, %v2421
        %v2444 = vadd.f32 %v2009, %v2426
        %v2445 = vadd.f32 %v2012, %v2429
        %v2446 = vadd.f32 %v2017, %v2434
        %v2447 = vadd.f32 %v2020, %v2437
        %v2448 = vld [vmem:[%s6] sm:$0x1]
        %v2450 = vlaneseq
        %v2451 = vshrl.u32 %v2450, 7
        %v2452 = vsub.s32 0, %v2451
        %v2453 = vrot.slane %v2448, %v2452
        %v2455 = vadd.f32 %v2440, %v2453
        %v2456 = vadd.f32 %v2441, %v2453
        %v2457 = vadd.f32 %v2442, %v2453
        %v2458 = vadd.f32 %v2443, %v2453
        %v2459 = vadd.f32 %v2444, %v2453
        %v2460 = vadd.f32 %v2445, %v2453
        %v2461 = vadd.f32 %v2446, %v2453
        %v2462 = vadd.f32 %v2447, %v2453
        %vm2463 = vcmp.ge.f32.partialorder %v2455, 0.0
        %vm2464 = vcmp.ge.f32.partialorder %v2456, 0.0
        %vm2465 = vcmp.ge.f32.partialorder %v2457, 0.0
        %vm2466 = vcmp.ge.f32.partialorder %v2458, 0.0
        %vm2467 = vcmp.ge.f32.partialorder %v2459, 0.0
        %vm2468 = vcmp.ge.f32.partialorder %v2460, 0.0
        %vm2469 = vcmp.ge.f32.partialorder %v2461, 0.0
        %vm2470 = vcmp.ge.f32.partialorder %v2462, 0.0
        %v2471 = vstv %s379
        %v2472 = vmul.f32 %v2471, %v2455
        %v2473 = vmul.f32 %v2471, %v2456
        %v2474 = vmul.f32 %v2471, %v2457
        %v2475 = vmul.f32 %v2471, %v2458
        %v2476 = vmul.f32 %v2471, %v2459
        %v2477 = vmul.f32 %v2471, %v2460
        %v2478 = vmul.f32 %v2471, %v2461
        %v2479 = vmul.f32 %v2471, %v2462
        %v2480 = vsel %vm2463, %v2455, %v2472
        %v2481 = vsel %vm2464, %v2456, %v2473
        %v2482 = vsel %vm2465, %v2457, %v2474
        %v2483 = vsel %vm2466, %v2458, %v2475
        %v2484 = vsel %vm2467, %v2459, %v2476
        %v2485 = vsel %vm2468, %v2460, %v2477
        %v2486 = vsel %vm2469, %v2461, %v2478
        %v2487 = vsel %vm2470, %v2462, %v2479
        %v2488 = vsub.f32 %v2480, %v516
        %v2489 = vsub.f32 %v2481, %v517
        %v2490 = vsub.f32 %v2482, %v518
        %v2491 = vsub.f32 %v2483, %v519
        %v2492 = vsub.f32 %v2484, %v520
        %v2493 = vsub.f32 %v2485, %v521
        %v2494 = vsub.f32 %v2486, %v522
        %v2495 = vsub.f32 %v2487, %v523
        %v2496 = vpack.c.bf16 %v2489, %v2488
        %v2497 = vpack.c.bf16 %v2491, %v2490
        %v2498 = vpack.c.bf16 %v2493, %v2492
        %v2499 = vpack.c.bf16 %v2495, %v2494
        %v2500 = vsel %vm546, 0, %v2496
        %v2501 = vsel %vm546, 0, %v2497
        %v2502 = vsel %vm546, 0, %v2498
        %v2503 = vsel %vm547, 0, %v2499
        %v2504 = vsel %vm566, 0, %v2496
        %v2505 = vsel %vm566, 0, %v2497
        %v2506 = vsel %vm566, 0, %v2498
        %v2507 = vsel %vm567, 0, %v2499
        %v2508 = vsel %vm576, 0, %v2496
        %v2509 = vsel %vm576, 0, %v2497
        %v2510 = vsel %vm576, 0, %v2498
        %v2511 = vsel %vm577, 0, %v2499
        %v2512 = vsel %vm586, 0, %v2496
        %v2513 = vsel %vm587, 0, %v2497
        %v2514 = vsel %vm587, 0, %v2498
        %v2515 = vsel %vm587, 0, %v2499
        %v2516 = vsel %vm547, 0, %v2496
        %v2517 = vsel %vm546, 0, %v2499
        %v2518 = vsel %vm567, 0, %v2496
        %v2519 = vsel %vm566, 0, %v2499
        %v2521 = vshll.u32 %v2496, 16
        %v2523 = vrot.slane %v2521, 1
        %v2524 = vsel %vm572, %v602, %v2523
        %v2525 = vshrl.u32 %v2496, 16
        %v2527 = vor.u32 %v2525, %v2523
        %v2529 = vshll.u32 %v2497, 16
        %v2531 = vrot.slane %v2529, 1
        %v2532 = vsel %vm572, %v2527, %v2531
        %v2533 = vshrl.u32 %v2497, 16
        %v2535 = vor.u32 %v2533, %v2531
        %v2537 = vshll.u32 %v2498, 16
        %v2539 = vrot.slane %v2537, 1
        %v2540 = vsel %vm572, %v2535, %v2539
        %v2541 = vshrl.u32 %v2498, 16
        %v2543 = vor.u32 %v2541, %v2539
        %v2545 = vshll.u32 %v2499, 16
        %v2547 = vrot.slane %v2545, 1
        %v2548 = vsel %vm572, %v2543, %v2547
        %v2549 = vshrl.u32 %v2499, 16
        %v2551 = vor.u32 %v2549, %v2547
        %2552 = vrot.lane.b32.xlu0 %v2524, 8
        %v2553 = vpop.permute.xlu0 %2552
        %2554 = vrot.lane.b32.xlu0 %v2532, 8
        %v2555 = vpop.permute.xlu0 %2554
        %2556 = vrot.lane.b32.xlu0 %v2540, 8
        %v2557 = vpop.permute.xlu0 %2556
        %2558 = vrot.lane.b32.xlu0 %v2548, 8
        %v2559 = vpop.permute.xlu0 %2558
        %2560 = vrot.lane.b32.xlu0 %v2551, 8
        %v2561 = vpop.permute.xlu0 %2560
        %v2566 = vrot.slane %v2504, 1
        %v2567 = vsel %vm650, %v651, %v2566
        %v2568 = vrot.slane %v2505, 1
        %v2569 = vsel %vm650, %v2566, %v2568
        %v2570 = vrot.slane %v2506, 1
        %v2571 = vsel %vm650, %v2568, %v2570
        %v2572 = vrot.slane %v2507, 1
        %v2573 = vsel %vm650, %v2570, %v2572
        %2574 = vrot.lane.b32.xlu0 %v2567, 16
        %v2575 = vpop.permute.xlu0 %2574
        %2576 = vrot.lane.b32.xlu0 %v2569, 16
        %v2577 = vpop.permute.xlu0 %2576
        %2578 = vrot.lane.b32.xlu0 %v2571, 16
        %v2579 = vpop.permute.xlu0 %2578
        %2580 = vrot.lane.b32.xlu0 %v2573, 16
        %v2581 = vpop.permute.xlu0 %2580
        %2582 = vrot.lane.b32.xlu0 %v2572, 16
        %v2583 = vpop.permute.xlu0 %2582
        %v2588 = vrot.slane %v2508, 4
        %v2589 = vsel %vm674, %v675, %v2588
        %v2590 = vrot.slane %v2509, 4
        %v2591 = vsel %vm674, %v2588, %v2590
        %v2592 = vrot.slane %v2510, 4
        %v2593 = vsel %vm674, %v2590, %v2592
        %v2594 = vrot.slane %v2511, 4
        %v2595 = vsel %vm674, %v2592, %v2594
        %2596 = vrot.lane.b32.xlu0 %v2589, 24
        %v2597 = vpop.permute.xlu0 %2596
        %2598 = vrot.lane.b32.xlu0 %v2591, 24
        %v2599 = vpop.permute.xlu0 %2598
        %2600 = vrot.lane.b32.xlu0 %v2593, 24
        %v2601 = vpop.permute.xlu0 %2600
        %2602 = vrot.lane.b32.xlu0 %v2595, 24
        %v2603 = vpop.permute.xlu0 %2602
        %2604 = vrot.lane.b32.xlu0 %v2594, 24
        %v2605 = vpop.permute.xlu0 %2604
        %v2606 = vrot.slane %v2525, 4
        %v2607 = vrot.slane %v2521, 5
        %v2608 = vor.u32 %v2606, %v2607
        %v2609 = vrot.slane %v2533, 4
        %v2610 = vrot.slane %v2529, 5
        %v2611 = vor.u32 %v2609, %v2610
        %v2612 = vsel %vm536, %v2608, %v2611
        %v2613 = vrot.slane %v2541, 4
        %v2614 = vrot.slane %v2537, 5
        %v2615 = vor.u32 %v2613, %v2614
        %v2616 = vsel %vm536, %v2611, %v2615
        %v2617 = vrot.slane %v2549, 4
        %v2618 = vrot.slane %v2545, 5
        %v2619 = vor.u32 %v2617, %v2618
        %v2620 = vsel %vm536, %v2615, %v2619
        %2621 = vrot.lane.b32.xlu0 %v2608, 32
        %v2622 = vpop.permute.xlu0 %2621
        %2623 = vrot.lane.b32.xlu0 %v2612, 32
        %v2624 = vpop.permute.xlu0 %2623
        %2625 = vrot.lane.b32.xlu0 %v2616, 32
        %v2626 = vpop.permute.xlu0 %2625
        %2627 = vrot.lane.b32.xlu0 %v2620, 32
        %v2628 = vpop.permute.xlu0 %2627
        %2629 = vrot.lane.b32.xlu0 %v2619, 32
        %v2630 = vpop.permute.xlu0 %2629
        %v2635 = vrot.slane %v2512, 5
        %v2636 = vrot.slane %v2513, 5
        %v2637 = vsel %vm723, %v2635, %v2636
        %v2638 = vrot.slane %v2514, 5
        %v2639 = vsel %vm723, %v2636, %v2638
        %v2640 = vrot.slane %v2515, 5
        %v2641 = vsel %vm723, %v2638, %v2640
        %v2642 = vsel %vm723, %v2640, %v731
        %2643 = vrot.lane.b32.xlu0 %v2635, 40
        %v2644 = vpop.permute.xlu0 %2643
        %2645 = vrot.lane.b32.xlu0 %v2637, 40
        %v2646 = vpop.permute.xlu0 %2645
        %2647 = vrot.lane.b32.xlu0 %v2639, 40
        %v2648 = vpop.permute.xlu0 %2647
        %2649 = vrot.lane.b32.xlu0 %v2641, 40
        %v2650 = vpop.permute.xlu0 %2649
        %2651 = vrot.lane.b32.xlu0 %v2642, 40
        %v2652 = vpop.permute.xlu0 %2651
        %2657 = vrot.lane.b32.xlu0 %v2516, 48
        %v2658 = vpop.permute.xlu0 %2657
        %2659 = vrot.lane.b32.xlu0 %v2501, 48
        %v2660 = vpop.permute.xlu0 %2659
        %2661 = vrot.lane.b32.xlu0 %v2502, 48
        %v2662 = vpop.permute.xlu0 %2661
        %2663 = vrot.lane.b32.xlu0 %v2517, 48
        %v2664 = vpop.permute.xlu0 %2663
        %v2665 = vsel %vm572, %v2551, %v601
        %2666 = vrot.lane.b32.xlu0 %v2532, 56
        %v2667 = vpop.permute.xlu0 %2666
        %2668 = vrot.lane.b32.xlu0 %v2540, 56
        %v2669 = vpop.permute.xlu0 %2668
        %2670 = vrot.lane.b32.xlu0 %v2548, 56
        %v2671 = vpop.permute.xlu0 %2670
        %2672 = vrot.lane.b32.xlu0 %v2665, 56
        %v2673 = vpop.permute.xlu0 %2672
        %v2676 = vrot.slane %v2518, 1
        %v2677 = vsel %vm650, %v2676, %v2568
        %v2678 = vrot.slane %v2519, 1
        %v2679 = vsel %vm650, %v2570, %v2678
        %v2680 = vsel %vm650, %v2678, %v651
        %2681 = vrot.lane.b32.xlu0 %v2677, 64
        %v2682 = vpop.permute.xlu0 %2681
        %2683 = vrot.lane.b32.xlu0 %v2571, 64
        %v2684 = vpop.permute.xlu0 %2683
        %2685 = vrot.lane.b32.xlu0 %v2679, 64
        %v2686 = vpop.permute.xlu0 %2685
        %2687 = vrot.lane.b32.xlu0 %v2680, 64
        %v2688 = vpop.permute.xlu0 %2687
        %v2690 = vsel %vm785, 0, %v2553
        %v2693 = vsel %vm785, %v2500, %v2555
        %v2696 = vsel %vm785, %v2501, %v2557
        %v2699 = vsel %vm785, %v2502, %v2559
        %v2702 = vsel %vm785, %v2503, %v2561
        %v2704 = vsel %vm800, %v2690, %v2575
        %v2706 = vsel %vm800, %v2693, %v2577
        %v2708 = vsel %vm800, %v2696, %v2579
        %v2710 = vsel %vm800, %v2699, %v2581
        %v2712 = vsel %vm800, %v2702, %v2583
        %v2714 = vsel %vm811, %v2704, %v2597
        %v2716 = vsel %vm811, %v2706, %v2599
        %v2718 = vsel %vm811, %v2708, %v2601
        %v2720 = vsel %vm811, %v2710, %v2603
        %v2722 = vsel %vm811, %v2712, %v2605
        %v2724 = vsel %vm822, %v2714, %v2622
        %v2726 = vsel %vm822, %v2716, %v2624
        %v2728 = vsel %vm822, %v2718, %v2626
        %v2730 = vsel %vm822, %v2720, %v2628
        %v2732 = vsel %vm822, %v2722, %v2630
        %v2734 = vsel %vm833, %v2724, %v2644
        %v2736 = vsel %vm833, %v2726, %v2646
        %v2738 = vsel %vm833, %v2728, %v2648
        %v2740 = vsel %vm833, %v2730, %v2650
        %v2742 = vsel %vm833, %v2732, %v2652
        %v2744 = vsel %vm844, %v2734, %v2658
        %v2746 = vsel %vm844, %v2736, %v2660
        %v2748 = vsel %vm844, %v2738, %v2662
        %v2750 = vsel %vm844, %v2740, %v2664
        %v2751 = vsel %vm844, %v2742, %v756
        %v2753 = vsel %vm855, %v2744, %v2667
        %v2755 = vsel %vm855, %v2746, %v2669
        %v2757 = vsel %vm855, %v2748, %v2671
        %v2759 = vsel %vm855, %v2750, %v2673
        %v2760 = vsel %vm855, %v2751, %v767
        %v2762 = vsel %vm866, %v2753, %v2682
        %v2764 = vsel %vm866, %v2755, %v2684
        %v2766 = vsel %vm866, %v2757, %v2686
        %v2768 = vsel %vm866, %v2759, %v2688
        %v2769 = vsel %vm866, %v2760, %v784
        %v2770 = vld [vmem:[%s7] sm:$0xf]
        %v2771 = vld [vmem:[%s7 + $0x4] sm:$0xf]
        %v2772 = vld [vmem:[%s7 + $0x8] sm:$0xf]
        %v2773 = vld [vmem:[%s7 + $0xc] sm:$0xf]
        %v2774 = vld [vmem:[%s7 + $0x10] sm:$0xf]
        %v2775 = vld [vmem:[%s7 + $0x14] sm:$0xf]
        %v2776 = vld [vmem:[%s7 + $0x18] sm:$0xf]
        %v2777 = vld [vmem:[%s7 + $0x1c] sm:$0xf]
        %v2778 = vld [vmem:[%s7 + $0x20] sm:$0xf]
        %v2779 = vld [vmem:[%s8] sm:$0x1]
        %v2781 = vlaneseq
        %v2782 = vshrl.u32 %v2781, 7
        %v2783 = vsub.s32 0, %v2782
        %v2784 = vrot.slane %v2779, %v2783
        %v2786 = vshrl.u32 %v2762, 16
        %v2788 = vrot.slane %v2786, 3
        %v2789 = vshll.u32 %v2762, 16
        %v2791 = vrot.slane %v2789, 4
        %v2792 = vor.u32 %v2788, %v2791
        %v2793 = vshrl.u32 %v2764, 16
        %v2795 = vrot.slane %v2793, 3
        %v2796 = vshll.u32 %v2764, 16
        %v2798 = vrot.slane %v2796, 4
        %v2799 = vor.u32 %v2795, %v2798
        %v2800 = vsel %vm556, %v2792, %v2799
        %v2801 = vshrl.u32 %v2766, 16
        %v2803 = vrot.slane %v2801, 3
        %v2804 = vshll.u32 %v2766, 16
        %v2806 = vrot.slane %v2804, 4
        %v2807 = vor.u32 %v2803, %v2806
        %v2808 = vsel %vm556, %v2799, %v2807
        %v2809 = vshrl.u32 %v2768, 16
        %v2811 = vrot.slane %v2809, 3
        %v2812 = vshll.u32 %v2768, 16
        %v2814 = vrot.slane %v2812, 4
        %v2815 = vor.u32 %v2811, %v2814
        %v2816 = vsel %vm556, %v2807, %v2815
        %v2817 = vshrl.u32 %v2769, 16
        %v2819 = vrot.slane %v2817, 3
        %v2820 = vshll.u32 %v2769, 16
        %v2822 = vrot.slane %v2820, 4
        %v2823 = vor.u32 %v2819, %v2822
        %v2824 = vsel %vm556, %v2815, %v2823
        %v2834 = vunpack.c.l.b16 %v2770
        %v2835 = vunpack.c.l.b16 %v2771
        %v2836 = vunpack.c.l.b16 %v2772
        %v2837 = vunpack.c.l.b16 %v2773
        %v2838 = vunpack.c.l.b16 %v2774
        %v2839 = vunpack.c.l.b16 %v2775
        %v2840 = vunpack.c.l.b16 %v2776
        %v2841 = vunpack.c.l.b16 %v2777
        %v2842 = vunpack.c.l.b16 %v2778
        %v2843 = vpack.c.b16 %v2835, %v2834
        %v2844 = vpack.c.b16 %v2837, %v2836
        %v2845 = vpack.c.b16 %v2839, %v2838
        %v2846 = vpack.c.b16 %v2841, %v2840
        %v2847 = vpack.c.b16 %v2842, %v2842
        %v2853 = vsel %vm959, %v2800, 0
        %v2856 = vsel %vm959, %v2808, 0
        %v2859 = vsel %vm959, %v2816, 0
        %v2862 = vsel %vm959, %v2824, 0
        %v2865 = vsel %vm972, %v2847, 0
        %2867 = vmatprep.subr.bf16.mxu0 0
        %2868 = vmatpush1.bf16.msra.mxu0 %v2843
        %2869 = vmatprep.subr.bf16.mxu0 0
        %2870 = vmatpush1.bf16.msra.mxu0 %v2844
        %2871 = vmatprep.subr.bf16.mxu0 0
        %2872 = vmatpush1.bf16.msra.mxu0 %v2845
        %2873 = vmatprep.subr.bf16.mxu0 0
        %2874 = vmatpush1.bf16.msra.mxu0 %v2846
        %2875 = vmatprep.subr.bf16.mxu0 0
        %2876 = vmatpush1.bf16.msra.mxu0 %v2865
        %2877 = vmatprep.subr.bf16.mxu0 0
        %2878 = vmatpush1.bf16.msra.mxu0 0
        %2879 = vmatprep.subr.bf16.mxu0 0
        %2880 = vmatpush1.bf16.msra.mxu0 0
        %2881 = vmatprep.subr.bf16.mxu0 0
        %2882 = vmatpush1.bf16.msra.mxu0 0
        %2883 = vmatprep.subr.bf16.mxu0 0
        %2884 = vmatpush1.bf16.msra.mxu0 0
        %2885 = vmatprep.subr.bf16.mxu0 0
        %2886 = vmatpush1.bf16.msra.mxu0 0
        %2887 = vmatprep.subr.bf16.mxu0 0
        %2888 = vmatpush1.bf16.msra.mxu0 0
        %2889 = vmatprep.subr.bf16.mxu0 0
        %2890 = vmatpush1.bf16.msra.mxu0 0
        %2891 = vmatprep.subr.bf16.mxu0 0
        %2892 = vmatpush1.bf16.msra.mxu0 0
        %2893 = vmatprep.subr.bf16.mxu0 0
        %2894 = vmatpush1.bf16.msra.mxu0 0
        %2895 = vmatprep.subr.bf16.mxu0 0
        %2896 = vmatpush1.bf16.msra.mxu0 0
        %2897 = vmatprep.subr.bf16.mxu0 0
        %2898 = vmatpush1.bf16.msra.mxu0 0
        %2899 = vmatprep.mubr.bf16.mxu0 0
        %2900 = vmatmul.mubr.bf16.gmra.mrb[0].mxu0 %v2853
        %v2901 = vpop.f32.mrb[0].mxu0
        %v2902 = vadd.f32 %v2784, %v2901
        %v2903 = vpop.f32.mrb[0].mxu0
        %v2904 = vpop.f32.mrb[0].mxu0
        %v2905 = vadd.f32 %v2784, %v2904
        %v2906 = vpop.f32.mrb[0].mxu0
        %2907 = vmatprep.mubr.bf16.mxu0 0
        %2908 = vmatmul.mubr.bf16.gmra.mrb[0].mxu0 %v2856
        %v2909 = vpop.f32.mrb[0].mxu0
        %v2910 = vadd.f32 %v2784, %v2909
        %v2911 = vpop.f32.mrb[0].mxu0
        %v2912 = vpop.f32.mrb[0].mxu0
        %v2913 = vadd.f32 %v2784, %v2912
        %v2914 = vpop.f32.mrb[0].mxu0
        %2915 = vmatprep.mubr.bf16.mxu0 0
        %2916 = vmatmul.mubr.bf16.gmra.mrb[0].mxu0 %v2859
        %v2917 = vpop.f32.mrb[0].mxu0
        %v2918 = vadd.f32 %v2784, %v2917
        %v2919 = vpop.f32.mrb[0].mxu0
        %v2920 = vpop.f32.mrb[0].mxu0
        %v2921 = vadd.f32 %v2784, %v2920
        %v2922 = vpop.f32.mrb[0].mxu0
        %2923 = vmatprep.mubr.bf16.mxu0 0
        %2924 = vmatmul.mubr.bf16.gmra.mrb[0].mxu0 %v2862
        %v2925 = vpop.f32.mrb[0].mxu0
        %v2926 = vadd.f32 %v2784, %v2925
        %v2927 = vpop.f32.mrb[0].mxu0
        %v2928 = vpop.f32.mrb[0].mxu0
        %v2929 = vadd.f32 %v2784, %v2928
        %v2930 = vpop.f32.mrb[0].mxu0
        %2931 = vdwg.mxu0
        %vm2932 = vcmp.ge.f32.partialorder %v2902, 0.0
        %vm2933 = vcmp.ge.f32.partialorder %v2905, 0.0
        %vm2934 = vcmp.ge.f32.partialorder %v2910, 0.0
        %vm2935 = vcmp.ge.f32.partialorder %v2913, 0.0
        %vm2936 = vcmp.ge.f32.partialorder %v2918, 0.0
        %vm2937 = vcmp.ge.f32.partialorder %v2921, 0.0
        %vm2938 = vcmp.ge.f32.partialorder %v2926, 0.0
        %vm2939 = vcmp.ge.f32.partialorder %v2929, 0.0
        %v2940 = vstv %s380
        %v2941 = vmul.f32 %v2940, %v2902
        %v2942 = vmul.f32 %v2940, %v2905
        %v2943 = vmul.f32 %v2940, %v2910
        %v2944 = vmul.f32 %v2940, %v2913
        %v2945 = vmul.f32 %v2940, %v2918
        %v2946 = vmul.f32 %v2940, %v2921
        %v2947 = vmul.f32 %v2940, %v2926
        %v2948 = vmul.f32 %v2940, %v2929
        %v2949 = vsel %vm2932, %v2902, %v2941
        %v2950 = vsel %vm2933, %v2905, %v2942
        %v2951 = vsel %vm2934, %v2910, %v2943
        %v2952 = vsel %vm2935, %v2913, %v2944
        %v2953 = vsel %vm2936, %v2918, %v2945
        %v2954 = vsel %vm2937, %v2921, %v2946
        %v2955 = vsel %vm2938, %v2926, %v2947
        %v2956 = vsel %vm2939, %v2929, %v2948
        %v2957 = vunpack.c.l.bf16 %v1066
        %v2958 = vunpack.c.h.bf16 %v1066
        %v2959 = vunpack.c.l.bf16 %v1067
        %v2960 = vunpack.c.h.bf16 %v1067
        %v2961 = vunpack.c.l.bf16 %v1068
        %v2962 = vunpack.c.h.bf16 %v1068
        %v2963 = vunpack.c.l.bf16 %v1069
        %v2964 = vunpack.c.h.bf16 %v1069
        %v2965 = vadd.f32 %v2949, %v2957
        %v2966 = vadd.f32 %v2950, %v2958
        %v2967 = vadd.f32 %v2951, %v2959
        %v2968 = vadd.f32 %v2952, %v2960
        %v2969 = vadd.f32 %v2953, %v2961
        %v2970 = vadd.f32 %v2954, %v2962
        %v2971 = vadd.f32 %v2955, %v2963
        %v2972 = vadd.f32 %v2956, %v2964
        %2973 = vst [vmem:[%s373] sm:$0xff] %v2965
        %2974 = vst [vmem:[%s373 + $0x8] sm:$0xff] %v2966
        %2975 = vst [vmem:[%s373 + $0x10] sm:$0xff] %v2967
        %2976 = vst [vmem:[%s373 + $0x18] sm:$0xff] %v2968
        %2977 = vst [vmem:[%s373 + $0x20] sm:$0xff] %v2969
        %2978 = vst [vmem:[%s373 + $0x28] sm:$0xff] %v2970
        %2979 = vst [vmem:[%s373 + $0x30] sm:$0xff] %v2971
        %2980 = vst [vmem:[%s373 + $0x38] sm:$0xff] %v2972
        %p2981 = scmp.lt.s32.totalorder %s22, 1
        %s2982 = scalar_select %p2981, %s22, 1
        %s2983 = smul.addr %s2982, 8
        %s2984 = smul.addr %s2983, 8
        %s2985 = scalar_lea.vmem %s10, %s2984
        // Predicated region
        $region65: #{rb2dbpn_forward.1} parent=59 // pred_check
          %p2986 = pneg %p255
        $region66: #{rb2dbpn_forward.1} parent=59 // pred_check_branch
          %2988 = sbr.rel (%p2986) target = $region68
        $region67: #{rb2dbpn_forward.1} parent=59 // pred_region
          _
        $region68: #{rb2dbpn_forward.1} parent=59 // pred_fallthru
          _
      $region60: #{rb2dbpn_forward.1} parent=5 // pred_fallthru
        _
      %p2989 = scmp.le.s32.totalorder 2, %s17
      // Predicated region
      $region69: #{rb2dbpn_forward.1} parent=5 // pred_check
        %p2990 = pneg %p2989
      $region70: #{rb2dbpn_forward.1} parent=5 // pred_check_branch
        %2992 = sbr.rel (%p2990) target = $region72
      $region71: #{rb2dbpn_forward.1} parent=5 // pred_region
        %s2993 = ssub.s32 %s17, 2
        // Predicated region
        $region73: #{rb2dbpn_forward.1} parent=71 // pred_check
          %p2994 = pneg %p261
        $region74: #{rb2dbpn_forward.1} parent=71 // pred_check_branch
          %2996 = sbr.rel (%p2994) target = $region76
        $region75: #{rb2dbpn_forward.1} parent=71 // pred_region
          %p2997 = scmp.lt.s32.totalorder %s23, 1
          %s2998 = scalar_select %p2997, %s23, 1
          %s2999 = smul.addr %s2998, 8
          %s3000 = smul.addr %s2999, 8
          %s3001 = scalar_lea.vmem %s10, %s3000
        $region76: #{rb2dbpn_forward.1} parent=71 // pred_fallthru
          _
      $region72: #{rb2dbpn_forward.1} parent=5 // pred_fallthru
        _
    $region6: #{rb2dbpn_forward.1} parent=1 // loop_footer
      %s21 = sadd.s32 1, %s17
    $region7: #{rb2dbpn_forward.1} parent=1 // loop_footer_branch
      %16 = sbr.rel target = $region3
    $region8: #{rb2dbpn_forward.1} parent=1 // loop_exit
      _
    %3002 = vsyncpa [#allocation3], 1
    %s3003 = scalar_lea.sflag [#allocation3], 1
    %3004 = vsyncpa %s3003, 1

</llo_original>
